<compile_context>
chip_gen: v7x
topology: tpu7x:2x2x1
jax: 0.10.0
libtpu: 0.0.40
codegen_flags: <defaults>
</compile_context>

<pallas_src>
import numpy as np

import jax
import jax.numpy as jnp
from jax.experimental import pallas as pl
from jax.experimental.pallas import tpu as pltpu

BIG = 1e30          # sentinel distance for cross-batch / padded columns
SELECTED = 3.0e38   # finite float > any real key; marks already-chosen columns


# --------------------------------------------------------------------------
# Kernel
# --------------------------------------------------------------------------
def _make_kernel(*, k, masked, lane_bits):
    lane_mask = (1 << lane_bits) - 1      # low bits that carry the column id
    hi_mask = -(lane_mask + 1)            # clears those bits (two's complement)

    def kernel(cblk_ref,                  # [num_tiles] int32 scalar prefetch
               posskip_ref,               # [TM, 3]   fine positions (f32)
               psq_ref,                   # [TM, 1]   |pos_skip|^2 (f32, hoisted)
               xskip_ref,                 # [TM, Cs]  skip features (bf16)
               *refs):
        del cblk_ref
        if masked:
            (bskip_ref, post_ref, possq_ref, bpos_ref,
             xw1_ref, w1b_ref, b1_ref, w2_ref, b2_ref, out_ref) = refs
        else:
            (post_ref, possq_ref,
             xw1_ref, w1b_ref, b1_ref, w2_ref, b2_ref, out_ref) = refs
            bskip_ref = bpos_ref = None

        ps = posskip_ref[...]                                   # [TM, 3]
        pos_t = post_ref[...]                                   # [3, NB]
        tm_ = ps.shape[0]
        nb_ = pos_t.shape[1]

        # ---- pairwise squared distances (tiny f32 MXU matmul) -----------
        cross = jnp.dot(ps, pos_t, preferred_element_type=jnp.float32)  # [TM,NB]
        d2 = jnp.maximum(psq_ref[...] + possq_ref[...] - 2.0 * cross, 0.0)
        if masked:  # only when a coarse block may contain foreign-batch points
            d2 = jnp.where(bskip_ref[...] == bpos_ref[...], d2, jnp.float32(BIG))

        # ---- packed order-preserving key: truncated d2 bits | column ----
        # d2 >= 0, so its f32 bit pattern is monotone in value; stealing the
        # low `lane_bits` mantissa bits for the column id makes every key in a
        # row unique (deterministic first-argmin tie-break) while perturbing
        # the weight's d2 by < 2^-16 relative.
        col = jax.lax.broadcasted_iota(jnp.int32, (tm_, nb_), 1)
        kbits = (pltpu.bitcast(d2, jnp.int32) & jnp.int32(hi_mask)) | col
        keyf = pltpu.bitcast(kbits, jnp.float32)

        # ---- k-NN selection: ONE cross-lane reduce per iteration --------
        wmat = jnp.zeros((tm_, nb_), jnp.float32)
        wsum = jnp.zeros((tm_, 1), jnp.float32)
        for _ in range(k):
            minf = jnp.min(keyf, axis=1, keepdims=True)               # [TM,1]
            mbits = pltpu.bitcast(minf, jnp.int32)
            rowmin = pltpu.bitcast(mbits & jnp.int32(hi_mask), jnp.float32)
            w = 1.0 / jnp.maximum(rowmin, jnp.float32(1e-16))         # PyG clamp
            onehot = keyf == minf                                     # unique keys
            wmat = jnp.where(onehot, w, wmat)       # each col wins at most once
            wsum = wsum + w
            keyf = jnp.where(onehot, jnp.float32(SELECTED), keyf)

        # ---- interpolate + MLP (W1a folded into xw1; bf16 MXU operands) -
        inv = pl.reciprocal(wsum, approx=True)                        # EUP
        wmat_n = (wmat * inv).astype(jnp.bfloat16)                    # in [0,1]
        h = jnp.dot(wmat_n, xw1_ref[...], preferred_element_type=jnp.float32)
        h = h + jnp.dot(xskip_ref[...], w1b_ref[...],
                        preferred_element_type=jnp.float32)
        h = jnp.maximum(h + b1_ref[...], 0.0)                         # ReLU
        out = jnp.dot(h.astype(jnp.bfloat16), w2_ref[...],
                      preferred_element_type=jnp.float32) + b2_ref[...]
        out_ref[...] = out.astype(out_ref.dtype)

    return kernel


# --------------------------------------------------------------------------
# Planning helpers
# --------------------------------------------------------------------------
def _round_up(v, m):
    return ((v + m - 1) // m) * m


def _uniform_batch_layout(batch, batch_skip):
    """(num_groups, coarse_per_group, fine_per_group) if both batch vectors are
    sorted with equal-sized matching groups; otherwise None."""
    b = np.asarray(batch)
    s = np.asarray(batch_skip)
    if b.ndim != 1 or s.ndim != 1 or b.size == 0 or s.size == 0:
        return None
    if np.any(np.diff(b) < 0) or np.any(np.diff(s) < 0):
        return None
    ub, cb = np.unique(b, return_counts=True)
    us, cs = np.unique(s, return_counts=True)
    if len(ub) != len(us) or not np.array_equal(ub, us):
        return None
    if cb.min() != cb.max() or cs.min() != cs.max():
        return None
    return int(len(ub)), int(cb[0]), int(cs[0])


def _vmem_capacity_bytes():
    try:
        cap = getattr(pltpu.get_tpu_info(), "vmem_capacity_bytes", None)
        if cap:
            return int(cap)
    except Exception:
        pass
    return 64 * 1024 * 1024  # conservative default (v7x per-core VMEM)


def _tm_cap_rows(cap_bytes, nb):
    # ~12 live [TM, NB] f32/int32 temporaries in the statically unrolled k
    # loop, budgeted against ~1/6 of physical VMEM (leaves room for the
    # double-buffered xw1 block, weights and the pipelined I/O streams).
    cap = (cap_bytes // 6) // max(12 * nb * 4, 1)
    cap = (cap // 16) * 16
    return max(16, min(2048, cap))


def _pick_tm(rows_per_group, total_rows, cap_rows):
    """Largest tile that divides rows_per_group, is a multiple of 16 (or 8 as
    a fallback), fits cap_rows, and (if possible) gives >= 2 grid tiles."""
    cap = max(int(cap_rows), 8)

    def cands(step):
        hi = min(rows_per_group, cap)
        return [t for t in range(step, hi + 1, step) if rows_per_group % t == 0]

    c = cands(16) or cands(8)
    if not c:
        return None
    multi = [t for t in c if total_rows // t >= 2]
    return max(multi) if multi else max(c)


def _plan(uniform, layout, m, n, cap_bytes, tm_override):
    if uniform:
        num_groups, n_per, m_per = layout
    else:
        num_groups, n_per, m_per = 1, n, m
    nb = _round_up(max(n_per, 1), 128)
    cap_rows = _tm_cap_rows(cap_bytes, nb)
    if tm_override is not None:
        ok = (m_per % tm_override == 0) and (tm_override % 8 == 0 or tm_override == m)
        if not ok:
            return None
        tile_m = tm_override
    else:
        tile_m = _pick_tm(m_per, m, cap_rows)
        if tile_m is None:
            if uniform:
                return None
            tile_m = m_per          # whole-M single block (last-resort fallback)
    return num_groups, n_per, m_per, nb, tile_m


def _vmem_limit_bytes(cap_bytes, tile_m, nb, hp, cs, cop, masked):
    temps = 12 * tile_m * nb * 4                       # unrolled k-loop temporaries
    xw1 = 2 * nb * hp * 2                              # double-buffered bf16 xw1
    io = 2 * tile_m * (3 * 4 + 4 + cs * 2 + cop * 4 + (4 if masked else 0))
    coarse = 2 * (nb * 3 * 4 + nb * 4 + (nb * 4 if masked else 0))
    weights = 2 * (cs * hp * 2 + hp * 4 + hp * cop * 2 + cop * 4)
    est = temps + xw1 + io + coarse + weights + (8 << 20)
    return int(min(max(est, 16 << 20), cap_bytes * 3 // 4))


# --------------------------------------------------------------------------
# Wrapper
# --------------------------------------------------------------------------
def fp_module_forward(x, pos, batch, x_skip, pos_skip, batch_skip, params,
                      *, k, tm=None):
    """Returns (features_out, pos_skip, batch_skip) like the PyTorch module.

    params = (w1a, w1b, b1, w2, b2) implements self.nn as
    Linear(C_in + C_skip -> H) -> ReLU -> Linear(H -> C_out), with the first
    weight split into the interpolated part (w1a) and the skip part (w1b).
    The batch vectors must be concrete (the wrapper inspects them to choose
    the per-batch tiling; arbitrary layouts fall back to the masked path).
    """
    w1a, w1b, b1, w2, b2 = params
    n, c_in = x.shape
    m, c_skip = x_skip.shape
    hidden = w1a.shape[1]
    c_out = w2.shape[1]

    # ---- chip-aware tile planning ----------------------------------------
    cap_bytes = _vmem_capacity_bytes()      # 64 MiB (v7x) / 128 MiB (v5e, v6e)
    layout = _uniform_batch_layout(batch, batch_skip)
    uniform = layout is not None
    plan = _plan(True, layout, m, n, cap_bytes, tm) if uniform else None
    if plan is None:
        uniform = False
        plan = _plan(False, None, m, n, cap_bytes, tm)
    if plan is None:
        raise ValueError("no valid row-tile size (tm must divide the fine row "
                         "count and be a multiple of 8)")
    g, n_per, m_per, nb, tile_m = plan
    num_tiles = m // tile_m
    npad = nb - n_per
    lane_bits = max(1, (nb - 1).bit_length())

    # ---- lane-dense padding of the MLP dims -------------------------------
    hp = _round_up(hidden, 128)
    cop = _round_up(c_out, 128)
    w1a_p = jnp.pad(jnp.asarray(w1a, jnp.float32), ((0, 0), (0, hp - hidden)))
    w1b_p = jnp.pad(jnp.asarray(w1b, jnp.float32),
                    ((0, 0), (0, hp - hidden))).astype(jnp.bfloat16)
    b1_p = jnp.pad(jnp.asarray(b1, jnp.float32).reshape(1, hidden),
                   ((0, 0), (0, hp - hidden)))
    w2_p = jnp.pad(jnp.asarray(w2, jnp.float32),
                   ((0, hp - hidden), (0, cop - c_out))).astype(jnp.bfloat16)
    b2_p = jnp.pad(jnp.asarray(b2, jnp.float32).reshape(1, c_out),
                   ((0, 0), (0, cop - c_out)))

    # ---- host/XLA-side precompute (tiny) ----------------------------------
    xf = jnp.asarray(x, jnp.float32)
    xw1 = jnp.dot(xf, w1a_p).astype(jnp.bfloat16)                    # [N, Hp]
    posf = jnp.asarray(pos, jnp.float32)
    pos_sq = jnp.sum(posf * posf, axis=1)                            # [N]

    pos_g = jnp.pad(posf.reshape(g, n_per, 3), ((0, 0), (0, npad), (0, 0)))
    pos_b = jnp.swapaxes(pos_g, 1, 2)                                # [G, 3, NB]
    possq_b = jnp.pad(pos_sq.reshape(g, n_per), ((0, 0), (0, npad)),
                      constant_values=BIG).reshape(g, 1, nb)         # pad -> far
    xw1_b = jnp.pad(xw1.reshape(g, n_per, hp), ((0, 0), (0, npad), (0, 0)))

    posskip = jnp.asarray(pos_skip, jnp.float32)                     # [M, 3]
    psqskip = jnp.sum(posskip * posskip, axis=1, keepdims=True)      # [M, 1]
    xskip_bf = jnp.asarray(x_skip, jnp.bfloat16)                     # [M, Cs]

    if uniform:
        coarse_blk = (np.arange(num_tiles, dtype=np.int64) * tile_m) // m_per
    else:
        coarse_blk = np.zeros((num_tiles,), np.int64)
    coarse_blk = jnp.asarray(coarse_blk, jnp.int32)

    masked = not uniform
    kernel = _make_kernel(k=k, masked=masked, lane_bits=lane_bits)

    # ---- specs / inputs ----------------------------------------------------
    in_specs = [
        pl.BlockSpec((tile_m, 3), lambda i, c: (i, 0)),              # pos_skip
        pl.BlockSpec((tile_m, 1), lambda i, c: (i, 0)),              # |pos_skip|^2
        pl.BlockSpec((tile_m, c_skip), lambda i, c: (i, 0)),         # x_skip (bf16)
    ]
    inputs = [posskip, psqskip, xskip_bf]
    if masked:
        bskip = jnp.asarray(batch_skip, jnp.int32).reshape(m, 1)
        in_specs.append(pl.BlockSpec((tile_m, 1), lambda i, c: (i, 0)))
        inputs.append(bskip)
    in_specs += [
        pl.BlockSpec((None, 3, nb), lambda i, c: (c[i], 0, 0)),      # coarse pos^T
        pl.BlockSpec((None, 1, nb), lambda i, c: (c[i], 0, 0)),      # |coarse pos|^2
    ]
    inputs += [pos_b, possq_b]
    if masked:
        bpos_b = jnp.pad(jnp.asarray(batch, jnp.int32).reshape(g, n_per),
                         ((0, 0), (0, npad)), constant_values=-1).reshape(g, 1, nb)
        in_specs.append(pl.BlockSpec((None, 1, nb), lambda i, c: (c[i], 0, 0)))
        inputs.append(bpos_b)
    in_specs += [
        pl.BlockSpec((None, nb, hp), lambda i, c: (c[i], 0, 0)),     # x @ W1a (bf16)
        pl.BlockSpec((c_skip, hp), lambda i, c: (0, 0)),             # W1b (bf16)
        pl.BlockSpec((1, hp), lambda i, c: (0, 0)),                  # b1
        pl.BlockSpec((hp, cop), lambda i, c: (0, 0)),                # W2 (bf16)
        pl.BlockSpec((1, cop), lambda i, c: (0, 0)),                 # b2
    ]
    inputs += [xw1_b, w1b_p, b1_p, w2_p, b2_p]

    grid_spec = pltpu.PrefetchScalarGridSpec(
        num_scalar_prefetch=1,
        grid=(num_tiles,),
        in_specs=in_specs,
        out_specs=pl.BlockSpec((tile_m, cop), lambda i, c: (i, 0)),
    )

    vmem_limit = _vmem_limit_bytes(cap_bytes, tile_m, nb, hp, c_skip, cop, masked)

    out_pad = pl.pallas_call(
        kernel,
        out_shape=jax.ShapeDtypeStruct((m, cop), jnp.float32),
        grid_spec=grid_spec,
        compiler_params=pltpu.CompilerParams(
            dimension_semantics=("parallel",),
            vmem_limit_bytes=vmem_limit),
    )(coarse_blk, *inputs)

    return out_pad[:, :c_out], pos_skip, batch_skip


# --------------------------------------------------------------------------
# Pure-JAX reference (full precision)
# --------------------------------------------------------------------------
def _reference(x, pos, batch, x_skip, pos_skip, batch_skip, params, k):
    w1a, w1b, b1, w2, b2 = params
    d2 = jnp.sum((pos_skip[:, None, :] - pos[None, :, :]) ** 2, axis=-1)
    d2 = jnp.where(batch_skip[:, None] == batch[None, :], d2, BIG)
    idx = jnp.argsort(d2, axis=1)[:, :k]                       # [M, k]
    dk = jnp.take_along_axis(d2, idx, axis=1)
    w = 1.0 / jnp.maximum(dk, 1e-16)
    feats = x[idx]                                             # [M, k, Cin]
    y = jnp.sum(feats * w[..., None], axis=1) / jnp.sum(w, axis=1, keepdims=True)
    h = jnp.maximum(y @ w1a + x_skip @ w1b + b1, 0.0)
    return h @ w2 + b2


if __name__ == "__main__":
    key = jax.random.PRNGKey(0)
    K = 3
    B = 2                 # point clouds in the batch
    N_PER = 16            # coarse points per cloud
    M_PER = 32            # fine (skip) points per cloud
    N, M = B * N_PER, B * M_PER
    C_IN, C_SKIP, HIDDEN, C_OUT = 8, 8, 32, 16

    ks = jax.random.split(key, 9)
    x = jax.random.normal(ks[0], (N, C_IN), jnp.float32)
    pos = jax.random.normal(ks[1], (N, 3), jnp.float32)
    x_skip = jax.random.normal(ks[2], (M, C_SKIP), jnp.float32)
    pos_skip = jax.random.normal(ks[3], (M, 3), jnp.float32)
    batch = jnp.repeat(jnp.arange(B, dtype=jnp.int32), N_PER)
    batch_skip = jnp.repeat(jnp.arange(B, dtype=jnp.int32), M_PER)

    # deterministic "self.nn": Linear(C_IN+C_SKIP -> HIDDEN) -> ReLU -> Linear(HIDDEN -> C_OUT)
    w1 = 0.1 * jax.random.normal(ks[4], (C_IN + C_SKIP, HIDDEN), jnp.float32)
    w1a, w1b = w1[:C_IN], w1[C_IN:]
    b1 = 0.1 * jax.random.normal(ks[5], (1, HIDDEN), jnp.float32)
    w2 = 0.1 * jax.random.normal(ks[6], (HIDDEN, C_OUT), jnp.float32)
    b2 = 0.1 * jax.random.normal(ks[7], (1, C_OUT), jnp.float32)
    params = (w1a, w1b, b1, w2, b2)

    # Auto tile planner: picks TM=32 (multiple of 16, one group per tile),
    # giving a 2-tile "parallel" grid that exercises the per-batch coarse-block
    # prefetch path, lane-padded NB=128, and padded H/C_out=128.
    out, pos_out, batch_out = fp_module_forward(
        x, pos, batch, x_skip, pos_skip, batch_skip, params, k=K)
    out = jax.block_until_ready(out)

    ref = _reference(x, pos, batch, x_skip, pos_skip, batch_skip, params, K)
    assert out.shape == (M, C_OUT)
    err = float(jnp.max(jnp.abs(out - ref)))
    # bf16 MXU operands + approx reciprocal + truncated-key distances =>
    # looser tolerance than pure f32.
    assert err < 2e-2, f"mismatch vs. pure-JAX reference: max abs err = {err}"
    print("KERNEL_OK")
</pallas_src>

<mosaic_0001>
module attributes {stable_mosaic.version = 11 : i64} {
  func.func @kernel(%arg0: i32, %arg1: memref<2xi32, #tpu.memory_space<smem>>, %arg2: memref<32x3xf32, #tpu.memory_space<vmem>>, %arg3: memref<32x1xf32, #tpu.memory_space<vmem>>, %arg4: memref<32x8xbf16, #tpu.memory_space<vmem>>, %arg5: memref<1x3x128xf32, #tpu.memory_space<vmem>>, %arg6: memref<1x1x128xf32, #tpu.memory_space<vmem>>, %arg7: memref<1x128x128xbf16, #tpu.memory_space<vmem>>, %arg8: memref<8x128xbf16, #tpu.memory_space<vmem>>, %arg9: memref<1x128xf32, #tpu.memory_space<vmem>>, %arg10: memref<128x128xbf16, #tpu.memory_space<vmem>>, %arg11: memref<1x128xf32, #tpu.memory_space<vmem>>, %arg12: memref<32x128xf32, #tpu.memory_space<vmem>>) attributes {dimension_semantics = [#tpu.dimension_semantics<parallel>], iteration_bounds = array<i64: 2>, scalar_prefetch = 1 : i64, scratch_operands = 0 : i64, tpu.core_type = #tpu.core_type<tc>, window_params = [{transform_indices = @transform_0, window_bounds = array<i64: 32, 3>}, {transform_indices = @transform_1, window_bounds = array<i64: 32, 1>}, {transform_indices = @transform_2, window_bounds = array<i64: 32, 8>}, {transform_indices = @transform_3, window_bounds = array<i64: 1, 3, 128>}, {transform_indices = @transform_4, window_bounds = array<i64: 1, 1, 128>}, {transform_indices = @transform_5, window_bounds = array<i64: 1, 128, 128>}, {pipeline_mode = #tpu.pipeline_mode<synchronous>, transform_indices = @transform_6, window_bounds = array<i64: 8, 128>}, {pipeline_mode = #tpu.pipeline_mode<synchronous>, transform_indices = @transform_7, window_bounds = array<i64: 1, 128>}, {pipeline_mode = #tpu.pipeline_mode<synchronous>, transform_indices = @transform_8, window_bounds = array<i64: 128, 128>}, {pipeline_mode = #tpu.pipeline_mode<synchronous>, transform_indices = @transform_9, window_bounds = array<i64: 1, 128>}, {transform_indices = @transform_10, window_bounds = array<i64: 32, 128>}]} {
    %c0 = arith.constant 0 : index
    %c0_0 = arith.constant 0 : index
    %0 = vector.load %arg2[%c0, %c0_0] : memref<32x3xf32, #tpu.memory_space<vmem>>, vector<32x3xf32>
    %c0_1 = arith.constant 0 : index
    %c0_2 = arith.constant 0 : index
    %c0_3 = arith.constant 0 : index
    %1 = vector.load %arg5[%c0_1, %c0_2, %c0_3] : memref<1x3x128xf32, #tpu.memory_space<vmem>>, vector<1x3x128xf32>
    %2 = vector.shape_cast %1 : vector<1x3x128xf32> to vector<3x128xf32>
    %cst = arith.constant dense<0.000000e+00> : vector<32x128xf32>
    %3 = tpu.matmul %0, %2, %cst {dimension_numbers = #tpu.dot_dimension_numbers<[1], [0], [0], [1], [0, 0, 1, 1], [], []>} : vector<32x3xf32>, vector<3x128xf32>, vector<32x128xf32> -> vector<32x128xf32>
    %c0_4 = arith.constant 0 : index
    %c0_5 = arith.constant 0 : index
    %4 = vector.load %arg3[%c0_4, %c0_5] : memref<32x1xf32, #tpu.memory_space<vmem>>, vector<32x1xf32>
    %c0_6 = arith.constant 0 : index
    %c0_7 = arith.constant 0 : index
    %c0_8 = arith.constant 0 : index
    %5 = vector.load %arg6[%c0_6, %c0_7, %c0_8] : memref<1x1x128xf32, #tpu.memory_space<vmem>>, vector<1x1x128xf32>
    %6 = vector.shape_cast %5 : vector<1x1x128xf32> to vector<1x128xf32>
    %7 = vector.broadcast %4 : vector<32x1xf32> to vector<32x128xf32>
    %8 = vector.broadcast %6 : vector<1x128xf32> to vector<32x128xf32>
    %9 = arith.addf %7, %8 : vector<32x128xf32>
    %cst_9 = arith.constant 2.000000e+00 : f32
    %10 = vector.broadcast %cst_9 : f32 to vector<32x128xf32>
    %11 = arith.mulf %10, %3 : vector<32x128xf32>
    %12 = arith.subf %9, %11 : vector<32x128xf32>
    %cst_10 = arith.constant 0.000000e+00 : f32
    %13 = vector.broadcast %cst_10 : f32 to vector<32x128xf32>
    %14 = arith.maximumf %12, %13 : vector<32x128xf32>
    %15 = tpu.iota {dimensions = array<i32: 1>} : vector<32x128xi32>
    %16 = tpu.bitcast %14 : vector<32x128xf32> -> vector<32x128xi32>
    %c-128_i32 = arith.constant -128 : i32
    %17 = vector.broadcast %c-128_i32 : i32 to vector<32x128xi32>
    %18 = arith.andi %16, %17 : vector<32x128xi32>
    %19 = arith.ori %18, %15 : vector<32x128xi32>
    %20 = tpu.bitcast %19 : vector<32x128xi32> -> vector<32x128xf32>
    %cst_11 = arith.constant 0.000000e+00 : f32
    %21 = vector.broadcast %cst_11 : f32 to vector<32x128xf32>
    %cst_12 = arith.constant 0.000000e+00 : f32
    %22 = vector.broadcast %cst_12 : f32 to vector<32x1xf32>
    %cst_13 = arith.constant dense<0x7F800000> : vector<32xf32>
    %23 = vector.multi_reduction <minimumf>, %20, %cst_13 [1] : vector<32x128xf32> to vector<32xf32>
    %24 = vector.shape_cast %23 : vector<32xf32> to vector<32x1xf32>
    %25 = tpu.bitcast %24 : vector<32x1xf32> -> vector<32x1xi32>
    %c-128_i32_14 = arith.constant -128 : i32
    %26 = vector.broadcast %c-128_i32_14 : i32 to vector<32x1xi32>
    %27 = arith.andi %25, %26 : vector<32x1xi32>
    %28 = tpu.bitcast %27 : vector<32x1xi32> -> vector<32x1xf32>
    %cst_15 = arith.constant 1.000000e-16 : f32
    %29 = vector.broadcast %cst_15 : f32 to vector<32x1xf32>
    %30 = arith.maximumf %28, %29 : vector<32x1xf32>
    %cst_16 = arith.constant 1.000000e+00 : f32
    %31 = vector.broadcast %cst_16 : f32 to vector<32x1xf32>
    %32 = arith.divf %31, %30 : vector<32x1xf32>
    %33 = vector.broadcast %24 : vector<32x1xf32> to vector<32x128xf32>
    %34 = arith.cmpf oeq, %20, %33 : vector<32x128xf32>
    %35 = vector.shape_cast %32 : vector<32x1xf32> to vector<32x1xf32>
    %36 = vector.broadcast %35 : vector<32x1xf32> to vector<32x128xf32>
    %37 = arith.select %34, %36, %21 : vector<32x128xi1>, vector<32x128xf32>
    %38 = arith.addf %22, %32 : vector<32x1xf32>
    %cst_17 = arith.constant 3.000000e+38 : f32
    %39 = vector.broadcast %cst_17 : f32 to vector<32x128xf32>
    %40 = arith.select %34, %39, %20 : vector<32x128xi1>, vector<32x128xf32>
    %cst_18 = arith.constant dense<0x7F800000> : vector<32xf32>
    %41 = vector.multi_reduction <minimumf>, %40, %cst_18 [1] : vector<32x128xf32> to vector<32xf32>
    %42 = vector.shape_cast %41 : vector<32xf32> to vector<32x1xf32>
    %43 = tpu.bitcast %42 : vector<32x1xf32> -> vector<32x1xi32>
    %c-128_i32_19 = arith.constant -128 : i32
    %44 = vector.broadcast %c-128_i32_19 : i32 to vector<32x1xi32>
    %45 = arith.andi %43, %44 : vector<32x1xi32>
    %46 = tpu.bitcast %45 : vector<32x1xi32> -> vector<32x1xf32>
    %cst_20 = arith.constant 1.000000e-16 : f32
    %47 = vector.broadcast %cst_20 : f32 to vector<32x1xf32>
    %48 = arith.maximumf %46, %47 : vector<32x1xf32>
    %cst_21 = arith.constant 1.000000e+00 : f32
    %49 = vector.broadcast %cst_21 : f32 to vector<32x1xf32>
    %50 = arith.divf %49, %48 : vector<32x1xf32>
    %51 = vector.broadcast %42 : vector<32x1xf32> to vector<32x128xf32>
    %52 = arith.cmpf oeq, %40, %51 : vector<32x128xf32>
    %53 = vector.shape_cast %50 : vector<32x1xf32> to vector<32x1xf32>
    %54 = vector.broadcast %53 : vector<32x1xf32> to vector<32x128xf32>
    %55 = arith.select %52, %54, %37 : vector<32x128xi1>, vector<32x128xf32>
    %56 = arith.addf %38, %50 : vector<32x1xf32>
    %cst_22 = arith.constant 3.000000e+38 : f32
    %57 = vector.broadcast %cst_22 : f32 to vector<32x128xf32>
    %58 = arith.select %52, %57, %40 : vector<32x128xi1>, vector<32x128xf32>
    %cst_23 = arith.constant dense<0x7F800000> : vector<32xf32>
    %59 = vector.multi_reduction <minimumf>, %58, %cst_23 [1] : vector<32x128xf32> to vector<32xf32>
    %60 = vector.shape_cast %59 : vector<32xf32> to vector<32x1xf32>
    %61 = tpu.bitcast %60 : vector<32x1xf32> -> vector<32x1xi32>
    %c-128_i32_24 = arith.constant -128 : i32
    %62 = vector.broadcast %c-128_i32_24 : i32 to vector<32x1xi32>
    %63 = arith.andi %61, %62 : vector<32x1xi32>
    %64 = tpu.bitcast %63 : vector<32x1xi32> -> vector<32x1xf32>
    %cst_25 = arith.constant 1.000000e-16 : f32
    %65 = vector.broadcast %cst_25 : f32 to vector<32x1xf32>
    %66 = arith.maximumf %64, %65 : vector<32x1xf32>
    %cst_26 = arith.constant 1.000000e+00 : f32
    %67 = vector.broadcast %cst_26 : f32 to vector<32x1xf32>
    %68 = arith.divf %67, %66 : vector<32x1xf32>
    %69 = vector.broadcast %60 : vector<32x1xf32> to vector<32x128xf32>
    %70 = arith.cmpf oeq, %58, %69 : vector<32x128xf32>
    %71 = vector.shape_cast %68 : vector<32x1xf32> to vector<32x1xf32>
    %72 = vector.broadcast %71 : vector<32x1xf32> to vector<32x128xf32>
    %73 = arith.select %70, %72, %55 : vector<32x128xi1>, vector<32x128xf32>
    %74 = arith.addf %56, %68 : vector<32x1xf32>
    %75 = tpu.reciprocal %74 {approx = true} : vector<32x1xf32> -> vector<32x1xf32>
    %76 = vector.broadcast %75 : vector<32x1xf32> to vector<32x128xf32>
    %77 = arith.mulf %73, %76 : vector<32x128xf32>
    %78 = arith.truncf %77 : vector<32x128xf32> to vector<32x128xbf16>
    %c0_27 = arith.constant 0 : index
    %c0_28 = arith.constant 0 : index
    %c0_29 = arith.constant 0 : index
    %79 = vector.load %arg7[%c0_27, %c0_28, %c0_29] : memref<1x128x128xbf16, #tpu.memory_space<vmem>>, vector<1x128x128xbf16>
    %80 = vector.shape_cast %79 : vector<1x128x128xbf16> to vector<128x128xbf16>
    %cst_30 = arith.constant dense<0.000000e+00> : vector<32x128xf32>
    %81 = tpu.matmul %78, %80, %cst_30 {dimension_numbers = #tpu.dot_dimension_numbers<[1], [0], [0], [1], [0, 0, 1, 1], [], []>} : vector<32x128xbf16>, vector<128x128xbf16>, vector<32x128xf32> -> vector<32x128xf32>
    %c0_31 = arith.constant 0 : index
    %c0_32 = arith.constant 0 : index
    %82 = vector.load %arg4[%c0_31, %c0_32] : memref<32x8xbf16, #tpu.memory_space<vmem>>, vector<32x8xbf16>
    %c0_33 = arith.constant 0 : index
    %c0_34 = arith.constant 0 : index
    %83 = vector.load %arg8[%c0_33, %c0_34] : memref<8x128xbf16, #tpu.memory_space<vmem>>, vector<8x128xbf16>
    %cst_35 = arith.constant dense<0.000000e+00> : vector<32x128xf32>
    %84 = tpu.matmul %82, %83, %cst_35 {dimension_numbers = #tpu.dot_dimension_numbers<[1], [0], [0], [1], [0, 0, 1, 1], [], []>} : vector<32x8xbf16>, vector<8x128xbf16>, vector<32x128xf32> -> vector<32x128xf32>
    %85 = arith.addf %81, %84 : vector<32x128xf32>
    %c0_36 = arith.constant 0 : index
    %c0_37 = arith.constant 0 : index
    %86 = vector.load %arg9[%c0_36, %c0_37] : memref<1x128xf32, #tpu.memory_space<vmem>>, vector<1x128xf32>
    %87 = vector.broadcast %86 : vector<1x128xf32> to vector<32x128xf32>
    %88 = arith.addf %85, %87 : vector<32x128xf32>
    %cst_38 = arith.constant 0.000000e+00 : f32
    %89 = vector.broadcast %cst_38 : f32 to vector<32x128xf32>
    %90 = arith.maximumf %88, %89 : vector<32x128xf32>
    %91 = arith.truncf %90 : vector<32x128xf32> to vector<32x128xbf16>
    %c0_39 = arith.constant 0 : index
    %c0_40 = arith.constant 0 : index
    %92 = vector.load %arg10[%c0_39, %c0_40] : memref<128x128xbf16, #tpu.memory_space<vmem>>, vector<128x128xbf16>
    %cst_41 = arith.constant dense<0.000000e+00> : vector<32x128xf32>
    %93 = tpu.matmul %91, %92, %cst_41 {dimension_numbers = #tpu.dot_dimension_numbers<[1], [0], [0], [1], [0, 0, 1, 1], [], []>} : vector<32x128xbf16>, vector<128x128xbf16>, vector<32x128xf32> -> vector<32x128xf32>
    %c0_42 = arith.constant 0 : index
    %c0_43 = arith.constant 0 : index
    %94 = vector.load %arg11[%c0_42, %c0_43] : memref<1x128xf32, #tpu.memory_space<vmem>>, vector<1x128xf32>
    %95 = vector.broadcast %94 : vector<1x128xf32> to vector<32x128xf32>
    %96 = arith.addf %93, %95 : vector<32x128xf32>
    %c0_44 = arith.constant 0 : index
    %c0_45 = arith.constant 0 : index
    %97 = vector.load %arg12[%c0_44, %c0_45] : memref<32x128xf32, #tpu.memory_space<vmem>>, vector<32x128xf32>
    tpu.vector_store %arg12[%c0_44, %c0_45], %96 {strides = array<i32>} : memref<32x128xf32, #tpu.memory_space<vmem>>, vector<32x128xf32>,
    return
  }
  func.func @transform_0(%arg0: i32, %arg1: memref<2xi32, #tpu.memory_space<smem>>) -> (i32, i32) {
    %c0_i32 = arith.constant 0 : i32
    %c0_i32_0 = arith.constant 0 : i32
    return %arg0, %c0_i32 : i32, i32
  }
  func.func @transform_1(%arg0: i32, %arg1: memref<2xi32, #tpu.memory_space<smem>>) -> (i32, i32) {
    %c0_i32 = arith.constant 0 : i32
    %c0_i32_0 = arith.constant 0 : i32
    return %arg0, %c0_i32 : i32, i32
  }
  func.func @transform_2(%arg0: i32, %arg1: memref<2xi32, #tpu.memory_space<smem>>) -> (i32, i32) {
    %c0_i32 = arith.constant 0 : i32
    %c0_i32_0 = arith.constant 0 : i32
    return %arg0, %c0_i32 : i32, i32
  }
  func.func @transform_3(%arg0: i32, %arg1: memref<2xi32, #tpu.memory_space<smem>>) -> (i32, i32, i32) {
    %0 = arith.index_cast %arg0 : i32 to index
    %1 = memref.load %arg1[%0] : memref<2xi32, #tpu.memory_space<smem>>
    %c0_i32 = arith.constant 0 : i32
    %c0_i32_0 = arith.constant 0 : i32
    %c0_i32_1 = arith.constant 0 : i32
    return %1, %c0_i32, %c0_i32_0 : i32, i32, i32
  }
  func.func @transform_4(%arg0: i32, %arg1: memref<2xi32, #tpu.memory_space<smem>>) -> (i32, i32, i32) {
    %0 = arith.index_cast %arg0 : i32 to index
    %1 = memref.load %arg1[%0] : memref<2xi32, #tpu.memory_space<smem>>
    %c0_i32 = arith.constant 0 : i32
    %c0_i32_0 = arith.constant 0 : i32
    %c0_i32_1 = arith.constant 0 : i32
    return %1, %c0_i32, %c0_i32_0 : i32, i32, i32
  }
  func.func @transform_5(%arg0: i32, %arg1: memref<2xi32, #tpu.memory_space<smem>>) -> (i32, i32, i32) {
    %0 = arith.index_cast %arg0 : i32 to index
    %1 = memref.load %arg1[%0] : memref<2xi32, #tpu.memory_space<smem>>
    %c0_i32 = arith.constant 0 : i32
    %c0_i32_0 = arith.constant 0 : i32
    %c0_i32_1 = arith.constant 0 : i32
    return %1, %c0_i32, %c0_i32_0 : i32, i32, i32
  }
  func.func @transform_6(%arg0: i32, %arg1: memref<2xi32, #tpu.memory_space<smem>>) -> (i32, i32) {
    %c0_i32 = arith.constant 0 : i32
    %c0_i32_0 = arith.constant 0 : i32
    %c0_i32_1 = arith.constant 0 : i32
    return %c0_i32, %c0_i32_0 : i32, i32
  }
  func.func @transform_7(%arg0: i32, %arg1: memref<2xi32, #tpu.memory_space<smem>>) -> (i32, i32) {
    %c0_i32 = arith.constant 0 : i32
    %c0_i32_0 = arith.constant 0 : i32
    %c0_i32_1 = arith.constant 0 : i32
    return %c0_i32, %c0_i32_0 : i32, i32
  }
  func.func @transform_8(%arg0: i32, %arg1: memref<2xi32, #tpu.memory_space<smem>>) -> (i32, i32) {
    %c0_i32 = arith.constant 0 : i32
    %c0_i32_0 = arith.constant 0 : i32
    %c0_i32_1 = arith.constant 0 : i32
    return %c0_i32, %c0_i32_0 : i32, i32
  }
  func.func @transform_9(%arg0: i32, %arg1: memref<2xi32, #tpu.memory_space<smem>>) -> (i32, i32) {
    %c0_i32 = arith.constant 0 : i32
    %c0_i32_0 = arith.constant 0 : i32
    %c0_i32_1 = arith.constant 0 : i32
    return %c0_i32, %c0_i32_0 : i32, i32
  }
  func.func @transform_10(%arg0: i32, %arg1: memref<2xi32, #tpu.memory_space<smem>>) -> (i32, i32) {
    %c0_i32 = arith.constant 0 : i32
    %c0_i32_0 = arith.constant 0 : i32
    return %arg0, %c0_i32 : i32, i32
  }
}

</mosaic_0001>

<llo_original>
// kernel: tpu_custom_call.1
$region0: #{tpu_custom_call.1}
  #allocation0 [shape = 'u32[]', space=smem, size = 0x4, offset = 0x4, fixed_abs, tag = 'smem constant byte address 0x4 - core index']
  #allocation1 [shape = 'u32[144,128]{1,0:T(1,128)}', space=vmem, size = 0x12000, scoped, tag = 'internal scratch']
  #allocation2 [shape = 's32[1]{0}', space=sflag, size = 0x4, scoped, tag = 'scoped memory for tpu_custom_call.1']
  #allocation3 [shape = 'u8[512]{0}', space=smem, size = 0x200, scoped, tag = 'prefetched SMEM operand 0']
  %s0 = inlined_call_operand.vmem [shape: s32[2], index: 0, kind: input, shape index: {}]
  %s1 = inlined_call_operand.vmem [shape: f32[64,3], index: 1, kind: input, shape index: {}]
  %s2 = inlined_call_operand.vmem [shape: f32[64,1], index: 2, kind: input, shape index: {}]
  %s3 = inlined_call_operand.vmem [shape: bf16[64,8], index: 3, kind: input, shape index: {}]
  %s4 = inlined_call_operand.vmem [shape: f32[2,3,128], index: 4, kind: input, shape index: {}]
  %s5 = inlined_call_operand.vmem [shape: f32[2,1,128], index: 5, kind: input, shape index: {}]
  %s6 = inlined_call_operand.vmem [shape: bf16[2,128,128], index: 6, kind: input, shape index: {}]
  %s7 = inlined_call_operand.vmem [shape: bf16[8,128], index: 7, kind: input, shape index: {}]
  %s8 = inlined_call_operand.vmem [shape: f32[1,128], index: 8, kind: input, shape index: {}]
  %s9 = inlined_call_operand.vmem [shape: bf16[128,128], index: 9, kind: input, shape index: {}]
  %s10 = inlined_call_operand.vmem [shape: f32[1,128], index: 10, kind: input, shape index: {}]
  %s11 = inlined_call_operand.hbm [shape: f32[64,128], index: 11, kind: output, shape index: {}]
  %s12 = sld [smem:[#allocation0]]
  $region73: #{tpu_custom_call.1} parent=0
    _
  %s14 = ssub.s32 1, %s12
  %s15 = scalar_select 0, %s14, %s12
  %s16 = sshll.u32 %s0, 4
  %s17 = int_to_ptr.vmem [resolvable:$true] %s16
  %19 = dma.vmem_to_smem %s17, 16, [#allocation3], [#allocation2]
  %20 = dma.done [#allocation2], 16
  %21 = sfence
  $region1: #{tpu_custom_call.1} parent=0
    #allocation4 [shape = 'u8[32768]{0}', space=vmem, size = 0x8000, scoped, tag = 'output window, operand 0']
    #allocation5 [shape = 's32[2]{0}', space=sflag, size = 0x8, scoped, tag = 'scoped memory for tpu_custom_call.1']
    %22 = vsyncpa [#allocation5], 0
    %s23 = scalar_lea.sflag [#allocation5], 1
    %24 = vsyncpa %s23, 0
    loop: start=0, step=1, limit=4
    $region2: #{tpu_custom_call.1} parent=1 // loop_pre_header
      _
    $region3: #{tpu_custom_call.1} parent=1 // loop_header
      %s26 = sphi 0, %s30
      %p27 = scmp.ge.s32.totalorder %s26, 4
      %s36 = sphi 0, %s38
      %s39 = sphi 0, %s36
      %s40 = sphi 0, %s39
      %s56 = sphi 0, %s40
      %s62 = sphi 0, %s64
      %s65 = sphi 0, %s62
      %s66 = sphi 0, %s65
      %s82 = sphi 0, %s66
      %s88 = sphi 0, %s90
      %s91 = sphi 0, %s88
      %s92 = sphi 0, %s91
      %s108 = sphi 0, %s92
      %s116 = sphi 0, %s118
      %s119 = sphi 0, %s116
      %s120 = sphi 0, %s119
      %s136 = sphi 0, %s120
      %s144 = sphi 0, %s146
      %s147 = sphi 0, %s144
      %s148 = sphi 0, %s147
      %s164 = sphi 0, %s148
      %s172 = sphi 0, %s174
      %s175 = sphi 0, %s172
      %s176 = sphi 0, %s175
      %s192 = sphi 0, %s176
      %s196 = sphi 0, %s196
      %s198 = sphi 0, %s196
      %s199 = sphi 0, %s198
      %s213 = sphi 0, %s199
      %s217 = sphi 0, %s217
      %s219 = sphi 0, %s217
      %s220 = sphi 0, %s219
      %s234 = sphi 0, %s220
      %s238 = sphi 0, %s238
      %s240 = sphi 0, %s238
      %s241 = sphi 0, %s240
      %s255 = sphi 0, %s241
      %s259 = sphi 0, %s259
      %s261 = sphi 0, %s259
      %s262 = sphi 0, %s261
      %s276 = sphi 0, %s262
      %s282 = sphi 0, %s284
      %s285 = sphi 0, %s282
      %s286 = sphi 0, %s285
      %s302 = sphi 0, %s286
    $region4: #{tpu_custom_call.1} parent=1 // loop_header_branch
      %29 = sbr.rel (%p27) target = $region8
    $region5: #{tpu_custom_call.1} parent=1 // loop_body
      %s31 = ssub.s32 %s26, 1
      %s32 = ssub.s32 %s26, 2
      %s33 = sadd.s32 %s26, 1
      %s34 = ssub.s32 %s26, %s33
      %p35 = scmp.eq.s32.totalorder %s34, 0
      %s37 = sadd.s32 %s36, 1
      %s38 = scalar_select %p35, %s36, %s37
      %p41 = pneg %p35
      %p42 = scmp.eq.s32.totalorder %s26, 1
      %p43 = por %p41, %p42
      %p44 = scmp.ne.s32.totalorder %s36, %s39
      %p45 = scmp.eq.s32.totalorder %s26, 0
      %p46 = por %p44, %p45
      %p47 = scmp.ne.s32.totalorder %s36, %s39
      %p48 = scmp.eq.s32.totalorder %s31, 1
      %p49 = por %p47, %p48
      %p50 = scmp.ne.s32.totalorder %s39, %s40
      %p51 = scmp.eq.s32.totalorder %s31, 0
      %p52 = por %p50, %p51
      %p53 = scmp.ne.s32.totalorder %s39, %s40
      %p54 = scmp.eq.s32.totalorder %s32, 1
      %p55 = por %p53, %p54
      %p57 = scmp.ne.s32.totalorder %s40, %s56
      %p58 = scmp.eq.s32.totalorder %s32, 0
      %p59 = por %p57, %p58
      %s60 = ssub.s32 %s26, %s33
      %p61 = scmp.eq.s32.totalorder %s60, 0
      %s63 = sadd.s32 %s62, 1
      %s64 = scalar_select %p61, %s62, %s63
      %p67 = pneg %p61
      %p68 = scmp.eq.s32.totalorder %s26, 1
      %p69 = por %p67, %p68
      %p70 = scmp.ne.s32.totalorder %s62, %s65
      %p71 = scmp.eq.s32.totalorder %s26, 0
      %p72 = por %p70, %p71
      %p73 = scmp.ne.s32.totalorder %s62, %s65
      %p74 = scmp.eq.s32.totalorder %s31, 1
      %p75 = por %p73, %p74
      %p76 = scmp.ne.s32.totalorder %s65, %s66
      %p77 = scmp.eq.s32.totalorder %s31, 0
      %p78 = por %p76, %p77
      %p79 = scmp.ne.s32.totalorder %s65, %s66
      %p80 = scmp.eq.s32.totalorder %s32, 1
      %p81 = por %p79, %p80
      %p83 = scmp.ne.s32.totalorder %s66, %s82
      %p84 = scmp.eq.s32.totalorder %s32, 0
      %p85 = por %p83, %p84
      %s86 = ssub.s32 %s26, %s33
      %p87 = scmp.eq.s32.totalorder %s86, 0
      %s89 = sadd.s32 %s88, 1
      %s90 = scalar_select %p87, %s88, %s89
      %p93 = pneg %p87
      %p94 = scmp.eq.s32.totalorder %s26, 1
      %p95 = por %p93, %p94
      %p96 = scmp.ne.s32.totalorder %s88, %s91
      %p97 = scmp.eq.s32.totalorder %s26, 0
      %p98 = por %p96, %p97
      %p99 = scmp.ne.s32.totalorder %s88, %s91
      %p100 = scmp.eq.s32.totalorder %s31, 1
      %p101 = por %p99, %p100
      %p102 = scmp.ne.s32.totalorder %s91, %s92
      %p103 = scmp.eq.s32.totalorder %s31, 0
      %p104 = por %p102, %p103
      %p105 = scmp.ne.s32.totalorder %s91, %s92
      %p106 = scmp.eq.s32.totalorder %s32, 1
      %p107 = por %p105, %p106
      %p109 = scmp.ne.s32.totalorder %s92, %s108
      %p110 = scmp.eq.s32.totalorder %s32, 0
      %p111 = por %p109, %p110
      %s112 = sld [smem:[#allocation3 + %s26]]
      %s113 = sld [smem:[#allocation3 + %s33]]
      %s114 = ssub.s32 %s112, %s113
      %p115 = scmp.eq.s32.totalorder %s114, 0
      %s117 = sadd.s32 %s116, 1
      %s118 = scalar_select %p115, %s116, %s117
      %p121 = pneg %p115
      %p122 = scmp.eq.s32.totalorder %s26, 1
      %p123 = por %p121, %p122
      %p124 = scmp.ne.s32.totalorder %s116, %s119
      %p125 = scmp.eq.s32.totalorder %s26, 0
      %p126 = por %p124, %p125
      %p127 = scmp.ne.s32.totalorder %s116, %s119
      %p128 = scmp.eq.s32.totalorder %s31, 1
      %p129 = por %p127, %p128
      %p130 = scmp.ne.s32.totalorder %s119, %s120
      %p131 = scmp.eq.s32.totalorder %s31, 0
      %p132 = por %p130, %p131
      %p133 = scmp.ne.s32.totalorder %s119, %s120
      %p134 = scmp.eq.s32.totalorder %s32, 1
      %p135 = por %p133, %p134
      %p137 = scmp.ne.s32.totalorder %s120, %s136
      %p138 = scmp.eq.s32.totalorder %s32, 0
      %p139 = por %p137, %p138
      %s140 = sld [smem:[#allocation3 + %s26]]
      %s141 = sld [smem:[#allocation3 + %s33]]
      %s142 = ssub.s32 %s140, %s141
      %p143 = scmp.eq.s32.totalorder %s142, 0
      %s145 = sadd.s32 %s144, 1
      %s146 = scalar_select %p143, %s144, %s145
      %p149 = pneg %p143
      %p150 = scmp.eq.s32.totalorder %s26, 1
      %p151 = por %p149, %p150
      %p152 = scmp.ne.s32.totalorder %s144, %s147
      %p153 = scmp.eq.s32.totalorder %s26, 0
      %p154 = por %p152, %p153
      %p155 = scmp.ne.s32.totalorder %s144, %s147
      %p156 = scmp.eq.s32.totalorder %s31, 1
      %p157 = por %p155, %p156
      %p158 = scmp.ne.s32.totalorder %s147, %s148
      %p159 = scmp.eq.s32.totalorder %s31, 0
      %p160 = por %p158, %p159
      %p161 = scmp.ne.s32.totalorder %s147, %s148
      %p162 = scmp.eq.s32.totalorder %s32, 1
      %p163 = por %p161, %p162
      %p165 = scmp.ne.s32.totalorder %s148, %s164
      %p166 = scmp.eq.s32.totalorder %s32, 0
      %p167 = por %p165, %p166
      %s168 = sld [smem:[#allocation3 + %s26]]
      %s169 = sld [smem:[#allocation3 + %s33]]
      %s170 = ssub.s32 %s168, %s169
      %p171 = scmp.eq.s32.totalorder %s170, 0
      %s173 = sadd.s32 %s172, 1
      %s174 = scalar_select %p171, %s172, %s173
      %p177 = pneg %p171
      %p178 = scmp.eq.s32.totalorder %s26, 1
      %p179 = por %p177, %p178
      %p180 = scmp.ne.s32.totalorder %s172, %s175
      %p181 = scmp.eq.s32.totalorder %s26, 0
      %p182 = por %p180, %p181
      %p183 = scmp.ne.s32.totalorder %s172, %s175
      %p184 = scmp.eq.s32.totalorder %s31, 1
      %p185 = por %p183, %p184
      %p186 = scmp.ne.s32.totalorder %s175, %s176
      %p187 = scmp.eq.s32.totalorder %s31, 0
      %p188 = por %p186, %p187
      %p189 = scmp.ne.s32.totalorder %s175, %s176
      %p190 = scmp.eq.s32.totalorder %s32, 1
      %p191 = por %p189, %p190
      %p193 = scmp.ne.s32.totalorder %s176, %s192
      %p194 = scmp.eq.s32.totalorder %s32, 0
      %p195 = por %p193, %p194
      %s197 = sadd.s32 %s196, 1
      %p200 = scmp.eq.s32.totalorder %s26, 1
      %p201 = scmp.ne.s32.totalorder %s196, %s198
      %p202 = scmp.eq.s32.totalorder %s26, 0
      %p203 = por %p201, %p202
      %p204 = scmp.ne.s32.totalorder %s196, %s198
      %p205 = scmp.eq.s32.totalorder %s31, 1
      %p206 = por %p204, %p205
      %p207 = scmp.ne.s32.totalorder %s198, %s199
      %p208 = scmp.eq.s32.totalorder %s31, 0
      %p209 = por %p207, %p208
      %p210 = scmp.ne.s32.totalorder %s198, %s199
      %p211 = scmp.eq.s32.totalorder %s32, 1
      %p212 = por %p210, %p211
      %p214 = scmp.ne.s32.totalorder %s199, %s213
      %p215 = scmp.eq.s32.totalorder %s32, 0
      %p216 = por %p214, %p215
      %s218 = sadd.s32 %s217, 1
      %p221 = scmp.eq.s32.totalorder %s26, 1
      %p222 = scmp.ne.s32.totalorder %s217, %s219
      %p223 = scmp.eq.s32.totalorder %s26, 0
      %p224 = por %p222, %p223
      %p225 = scmp.ne.s32.totalorder %s217, %s219
      %p226 = scmp.eq.s32.totalorder %s31, 1
      %p227 = por %p225, %p226
      %p228 = scmp.ne.s32.totalorder %s219, %s220
      %p229 = scmp.eq.s32.totalorder %s31, 0
      %p230 = por %p228, %p229
      %p231 = scmp.ne.s32.totalorder %s219, %s220
      %p232 = scmp.eq.s32.totalorder %s32, 1
      %p233 = por %p231, %p232
      %p235 = scmp.ne.s32.totalorder %s220, %s234
      %p236 = scmp.eq.s32.totalorder %s32, 0
      %p237 = por %p235, %p236
      %s239 = sadd.s32 %s238, 1
      %p242 = scmp.eq.s32.totalorder %s26, 1
      %p243 = scmp.ne.s32.totalorder %s238, %s240
      %p244 = scmp.eq.s32.totalorder %s26, 0
      %p245 = por %p243, %p244
      %p246 = scmp.ne.s32.totalorder %s238, %s240
      %p247 = scmp.eq.s32.totalorder %s31, 1
      %p248 = por %p246, %p247
      %p249 = scmp.ne.s32.totalorder %s240, %s241
      %p250 = scmp.eq.s32.totalorder %s31, 0
      %p251 = por %p249, %p250
      %p252 = scmp.ne.s32.totalorder %s240, %s241
      %p253 = scmp.eq.s32.totalorder %s32, 1
      %p254 = por %p252, %p253
      %p256 = scmp.ne.s32.totalorder %s241, %s255
      %p257 = scmp.eq.s32.totalorder %s32, 0
      %p258 = por %p256, %p257
      %s260 = sadd.s32 %s259, 1
      %p263 = scmp.eq.s32.totalorder %s26, 1
      %p264 = scmp.ne.s32.totalorder %s259, %s261
      %p265 = scmp.eq.s32.totalorder %s26, 0
      %p266 = por %p264, %p265
      %p267 = scmp.ne.s32.totalorder %s259, %s261
      %p268 = scmp.eq.s32.totalorder %s31, 1
      %p269 = por %p267, %p268
      %p270 = scmp.ne.s32.totalorder %s261, %s262
      %p271 = scmp.eq.s32.totalorder %s31, 0
      %p272 = por %p270, %p271
      %p273 = scmp.ne.s32.totalorder %s261, %s262
      %p274 = scmp.eq.s32.totalorder %s32, 1
      %p275 = por %p273, %p274
      %p277 = scmp.ne.s32.totalorder %s262, %s276
      %p278 = scmp.eq.s32.totalorder %s32, 0
      %p279 = por %p277, %p278
      %s280 = ssub.s32 %s26, %s33
      %p281 = scmp.eq.s32.totalorder %s280, 0
      %s283 = sadd.s32 %s282, 1
      %s284 = scalar_select %p281, %s282, %s283
      %p287 = pneg %p281
      %p288 = scmp.eq.s32.totalorder %s26, 1
      %p289 = por %p287, %p288
      %p290 = scmp.ne.s32.totalorder %s282, %s285
      %p291 = scmp.eq.s32.totalorder %s26, 0
      %p292 = por %p290, %p291
      %p293 = scmp.ne.s32.totalorder %s282, %s285
      %p294 = scmp.eq.s32.totalorder %s31, 1
      %p295 = por %p293, %p294
      %p296 = scmp.ne.s32.totalorder %s285, %s286
      %p297 = scmp.eq.s32.totalorder %s31, 0
      %p298 = por %p296, %p297
      %p299 = scmp.ne.s32.totalorder %s285, %s286
      %p300 = scmp.eq.s32.totalorder %s32, 1
      %p301 = por %p299, %p300
      %p303 = scmp.ne.s32.totalorder %s286, %s302
      %p304 = scmp.eq.s32.totalorder %s32, 0
      %p305 = por %p303, %p304
      %p306 = scmp.le.s32.totalorder 1, %s26
      %p307 = scmp.lt.s32.totalorder %s26, 3
      %p308 = pnand %p306, %p307
      %p309 = pneg %p308
      // Predicated region
      $region9: #{tpu_custom_call.1} parent=5 // pred_check
        _
      $region10: #{tpu_custom_call.1} parent=5 // pred_check_branch
        %311 = sbr.rel (%p308) target = $region12
      $region11: #{tpu_custom_call.1} parent=5 // pred_region
        %s312 = ssub.s32 %s26, 1
        // Predicated region
        $region13: #{tpu_custom_call.1} parent=11 // pred_check
          %p313 = pneg %p209
        $region14: #{tpu_custom_call.1} parent=11 // pred_check_branch
          %315 = sbr.rel (%p313) target = $region16
        $region15: #{tpu_custom_call.1} parent=11 // pred_region
          _
        $region16: #{tpu_custom_call.1} parent=11 // pred_fallthru
          _
        // Predicated region
        $region17: #{tpu_custom_call.1} parent=11 // pred_check
          %p316 = pneg %p230
        $region18: #{tpu_custom_call.1} parent=11 // pred_check_branch
          %318 = sbr.rel (%p316) target = $region20
        $region19: #{tpu_custom_call.1} parent=11 // pred_region
          _
        $region20: #{tpu_custom_call.1} parent=11 // pred_fallthru
          _
        // Predicated region
        $region21: #{tpu_custom_call.1} parent=11 // pred_check
          %p319 = pneg %p251
        $region22: #{tpu_custom_call.1} parent=11 // pred_check_branch
          %321 = sbr.rel (%p319) target = $region24
        $region23: #{tpu_custom_call.1} parent=11 // pred_region
          _
        $region24: #{tpu_custom_call.1} parent=11 // pred_fallthru
          _
        // Predicated region
        $region25: #{tpu_custom_call.1} parent=11 // pred_check
          %p322 = pneg %p272
        $region26: #{tpu_custom_call.1} parent=11 // pred_check_branch
          %324 = sbr.rel (%p322) target = $region28
        $region27: #{tpu_custom_call.1} parent=11 // pred_region
          _
        $region28: #{tpu_custom_call.1} parent=11 // pred_fallthru
          _
      $region12: #{tpu_custom_call.1} parent=5 // pred_fallthru
        _
      %p325 = scmp.lt.s32.totalorder %s26, 2
      // Predicated region
      $region29: #{tpu_custom_call.1} parent=5 // pred_check
        %p326 = pneg %p325
      $region30: #{tpu_custom_call.1} parent=5 // pred_check_branch
        %328 = sbr.rel (%p326) target = $region32
      $region31: #{tpu_custom_call.1} parent=5 // pred_region
        // Predicated region
        $region33: #{tpu_custom_call.1} parent=31 // pred_check
          %p329 = pneg %p46
        $region34: #{tpu_custom_call.1} parent=31 // pred_check_branch
          %331 = sbr.rel (%p329) target = $region36
        $region35: #{tpu_custom_call.1} parent=31 // pred_region
          %s332 = smul.u32 4, %s26
          %p333 = scmp.lt.s32.totalorder %s332, 7
          %s334 = scalar_select %p333, %s332, 7
          %s335 = smul.addr %s334, 8
          %s336 = scalar_lea.vmem %s1, %s335
          %s337 = smul.u32 4, %s26
        $region36: #{tpu_custom_call.1} parent=31 // pred_fallthru
          _
        // Predicated region
        $region37: #{tpu_custom_call.1} parent=31 // pred_check
          %p338 = pneg %p72
        $region38: #{tpu_custom_call.1} parent=31 // pred_check_branch
          %340 = sbr.rel (%p338) target = $region40
        $region39: #{tpu_custom_call.1} parent=31 // pred_region
          %s341 = smul.u32 4, %s26
          %p342 = scmp.lt.s32.totalorder %s341, 7
          %s343 = scalar_select %p342, %s341, 7
          %s344 = smul.addr %s343, 8
          %s345 = scalar_lea.vmem %s2, %s344
          %s346 = smul.u32 4, %s26
        $region40: #{tpu_custom_call.1} parent=31 // pred_fallthru
          _
        // Predicated region
        $region41: #{tpu_custom_call.1} parent=31 // pred_check
          %p347 = pneg %p98
        $region42: #{tpu_custom_call.1} parent=31 // pred_check_branch
          %349 = sbr.rel (%p347) target = $region44
        $region43: #{tpu_custom_call.1} parent=31 // pred_region
          %s350 = smul.u32 4, %s26
          %p351 = scmp.lt.s32.totalorder %s350, 7
          %s352 = scalar_select %p351, %s350, 7
          %s353 = smul.addr %s352, 4
          %s354 = scalar_lea.vmem %s3, %s353
          %s355 = smul.u32 4, %s26
        $region44: #{tpu_custom_call.1} parent=31 // pred_fallthru
          _
        // Predicated region
        $region45: #{tpu_custom_call.1} parent=31 // pred_check
          %p356 = pneg %p126
        $region46: #{tpu_custom_call.1} parent=31 // pred_check_branch
          %358 = sbr.rel (%p356) target = $region48
        $region47: #{tpu_custom_call.1} parent=31 // pred_region
          %s359 = sld [smem:[#allocation3 + %s26]]
          %p360 = scmp.lt.s32.totalorder %s359, 1
          %s361 = scalar_select %p360, %s359, 1
          %s362 = smul.addr %s361, 4
          %s363 = scalar_lea.vmem %s4, %s362
          %s364 = sld [smem:[#allocation3 + %s26]]
        $region48: #{tpu_custom_call.1} parent=31 // pred_fallthru
          _
        // Predicated region
        $region49: #{tpu_custom_call.1} parent=31 // pred_check
          %p365 = pneg %p154
        $region50: #{tpu_custom_call.1} parent=31 // pred_check_branch
          %367 = sbr.rel (%p365) target = $region52
        $region51: #{tpu_custom_call.1} parent=31 // pred_region
          %s368 = sld [smem:[#allocation3 + %s26]]
          %p369 = scmp.lt.s32.totalorder %s368, 1
          %s370 = scalar_select %p369, %s368, 1
          %s371 = scalar_lea.vmem %s5, %s370
          %s372 = sld [smem:[#allocation3 + %s26]]
        $region52: #{tpu_custom_call.1} parent=31 // pred_fallthru
          _
        // Predicated region
        $region53: #{tpu_custom_call.1} parent=31 // pred_check
          %p373 = pneg %p182
        $region54: #{tpu_custom_call.1} parent=31 // pred_check_branch
          %375 = sbr.rel (%p373) target = $region56
        $region55: #{tpu_custom_call.1} parent=31 // pred_region
          %s376 = sld [smem:[#allocation3 + %s26]]
          %p377 = scmp.lt.s32.totalorder %s376, 1
          %s378 = scalar_select %p377, %s376, 1
          %s379 = smul.addr %s378, 16
          %s380 = smul.addr %s379, 4
          %s381 = scalar_lea.vmem %s6, %s380
          %s382 = sld [smem:[#allocation3 + %s26]]
        $region56: #{tpu_custom_call.1} parent=31 // pred_fallthru
          _
      $region32: #{tpu_custom_call.1} parent=5 // pred_fallthru
        _
      %p383 = scmp.le.s32.totalorder 1, %s26
      %p384 = scmp.lt.s32.totalorder %s26, 3
      %p385 = pnand %p383, %p384
      %p386 = pneg %p385
      // Predicated region
      $region57: #{tpu_custom_call.1} parent=5 // pred_check
        _
      $region58: #{tpu_custom_call.1} parent=5 // pred_check_branch
        %388 = sbr.rel (%p385) target = $region60
      $region59: #{tpu_custom_call.1} parent=5 // pred_region
        %s389 = ssub.s32 %s26, 1
        %s390 = smul.u32 4, %s31
        %p391 = scmp.lt.s32.totalorder %s390, 7
        %s392 = scalar_select %p391, %s390, 7
        %s393 = smul.addr %s392, 8
        %s394 = scalar_lea.vmem %s1, %s393
        %p395 = pneg %p52
        %p396 = pneg %p49
        %s397 = smul.u32 4, %s31
        %p398 = scmp.lt.s32.totalorder %s397, 7
        %s399 = scalar_select %p398, %s397, 7
        %s400 = smul.addr %s399, 8
        %s401 = scalar_lea.vmem %s2, %s400
        %p402 = pneg %p78
        %p403 = pneg %p75
        %s404 = smul.u32 4, %s31
        %p405 = scmp.lt.s32.totalorder %s404, 7
        %s406 = scalar_select %p405, %s404, 7
        %s407 = smul.addr %s406, 4
        %s408 = scalar_lea.vmem %s3, %s407
        %p409 = pneg %p104
        %p410 = pneg %p101
        %s411 = sld [smem:[#allocation3 + %s31]]
        %p412 = scmp.lt.s32.totalorder %s411, 1
        %s413 = scalar_select %p412, %s411, 1
        %s414 = smul.addr %s413, 4
        %s415 = scalar_lea.vmem %s4, %s414
        %p416 = pneg %p132
        %p417 = pneg %p129
        %s418 = sld [smem:[#allocation3 + %s31]]
        %p419 = scmp.lt.s32.totalorder %s418, 1
        %s420 = scalar_select %p419, %s418, 1
        %s421 = scalar_lea.vmem %s5, %s420
        %p422 = pneg %p160
        %p423 = pneg %p157
        %s424 = sld [smem:[#allocation3 + %s31]]
        %p425 = scmp.lt.s32.totalorder %s424, 1
        %s426 = scalar_select %p425, %s424, 1
        %s427 = smul.addr %s426, 16
        %s428 = smul.addr %s427, 4
        %s429 = scalar_lea.vmem %s6, %s428
        %p430 = pneg %p188
        %p431 = pneg %p185
        %p432 = pneg %p209
        %p433 = pneg %p206
        %p434 = pneg %p230
        %p435 = pneg %p227
        %p436 = pneg %p251
        %p437 = pneg %p248
        %p438 = pneg %p272
        %p439 = pneg %p269
        %p440 = pneg %p298
        %p441 = pneg %p295
        %s442 = sand.u32 %s285, 1
        %s443 = scalar_lea.sflag [#allocation5], %s442
        %s444 = sand.u32 %s285, 1
        %s445 = smul.addr %s444, 32
        %s446 = scalar_lea.vmem [#allocation4], %s445
        %s447 = smul.u32 4, %s31
        %p448 = scmp.lt.s32.totalorder %s447, 7
        %s449 = scalar_select %p448, %s447, 7
        %s450 = smul.addr %s449, 8
        %s451 = scalar_lea.vmem %s1, %s450
        %s452 = smul.u32 4, %s31
        %s453 = smul.u32 4, %s31
        %p454 = scmp.lt.s32.totalorder %s453, 7
        %s455 = scalar_select %p454, %s453, 7
        %s456 = smul.addr %s455, 8
        %s457 = scalar_lea.vmem %s2, %s456
        %s458 = smul.u32 4, %s31
        %s459 = smul.u32 4, %s31
        %p460 = scmp.lt.s32.totalorder %s459, 7
        %s461 = scalar_select %p460, %s459, 7
        %s462 = smul.addr %s461, 4
        %s463 = scalar_lea.vmem %s3, %s462
        %s464 = smul.u32 4, %s31
        %s465 = sld [smem:[#allocation3 + %s31]]
        %p466 = scmp.lt.s32.totalorder %s465, 1
        %s467 = scalar_select %p466, %s465, 1
        %s468 = smul.addr %s467, 4
        %s469 = scalar_lea.vmem %s4, %s468
        %s470 = sld [smem:[#allocation3 + %s31]]
        %s471 = sld [smem:[#allocation3 + %s31]]
        %p472 = scmp.lt.s32.totalorder %s471, 1
        %s473 = scalar_select %p472, %s471, 1
        %s474 = scalar_lea.vmem %s5, %s473
        %s475 = sld [smem:[#allocation3 + %s31]]
        %s476 = sld [smem:[#allocation3 + %s31]]
        %p477 = scmp.lt.s32.totalorder %s476, 1
        %s478 = scalar_select %p477, %s476, 1
        %s479 = smul.addr %s478, 16
        %s480 = smul.addr %s479, 4
        %s481 = scalar_lea.vmem %s6, %s480
        %s482 = sld [smem:[#allocation3 + %s31]]
        %s483 = smul.u32 4, %s31
        %v485 = vld [vmem:[%s451] sm:$0xff]
        %v486 = vld [vmem:[%s451 + $0x8] sm:$0xff]
        %v487 = vld [vmem:[%s451 + $0x10] sm:$0xff]
        %v488 = vld [vmem:[%s451 + $0x18] sm:$0xff]
        %v489 = vld [vmem:[%s469] sm:$0x7]
        %vm490 = vcmask 23552
        %v492 = vsel %vm490, %v485, 0
        %v495 = vsel %vm490, %v486, 0
        %v498 = vsel %vm490, %v487, 0
        %v501 = vsel %vm490, %v488, 0
        %vm503 = vcmask 1042432
        %v505 = vsel %vm503, %v489, 0
        %507 = vmatprep.subr.mxu0 0.0
        %508 = vmatpush1.msra.mxu0 %v505
        %509 = vmatprep.subr.mxu0 0.0
        %510 = vmatpush1.msra.mxu0 0.0
        %511 = vmatprep.subr.mxu0 0.0
        %512 = vmatpush1.msra.mxu0 0.0
        %513 = vmatprep.subr.mxu0 0.0
        %514 = vmatpush1.msra.mxu0 0.0
        %515 = vmatprep.subr.mxu0 0.0
        %516 = vmatpush1.msra.mxu0 0.0
        %517 = vmatprep.subr.mxu0 0.0
        %518 = vmatpush1.msra.mxu0 0.0
        %519 = vmatprep.subr.mxu0 0.0
        %520 = vmatpush1.msra.mxu0 0.0
        %521 = vmatprep.subr.mxu0 0.0
        %522 = vmatpush1.msra.mxu0 0.0
        %523 = vmatprep.subr.mxu0 0.0
        %524 = vmatpush1.msra.mxu0 0.0
        %525 = vmatprep.subr.mxu0 0.0
        %526 = vmatpush1.msra.mxu0 0.0
        %527 = vmatprep.subr.mxu0 0.0
        %528 = vmatpush1.msra.mxu0 0.0
        %529 = vmatprep.subr.mxu0 0.0
        %530 = vmatpush1.msra.mxu0 0.0
        %531 = vmatprep.subr.mxu0 0.0
        %532 = vmatpush1.msra.mxu0 0.0
        %533 = vmatprep.subr.mxu0 0.0
        %534 = vmatpush1.msra.mxu0 0.0
        %535 = vmatprep.subr.mxu0 0.0
        %536 = vmatpush1.msra.mxu0 0.0
        %537 = vmatprep.subr.mxu0 0.0
        %538 = vmatpush1.msra.mxu0 0.0
        %539 = vmatprep.subr.mxu0 0.0
        %540 = vmatpush1.msra.mxu0 0.0
        %541 = vmatprep.subr.mxu0 0.0
        %542 = vmatpush1.msra.mxu0 0.0
        %543 = vmatprep.subr.mxu0 0.0
        %544 = vmatpush1.msra.mxu0 0.0
        %545 = vmatprep.subr.mxu0 0.0
        %546 = vmatpush1.msra.mxu0 0.0
        %547 = vmatprep.subr.mxu0 0.0
        %548 = vmatpush1.msra.mxu0 0.0
        %549 = vmatprep.subr.mxu0 0.0
        %550 = vmatpush1.msra.mxu0 0.0
        %551 = vmatprep.subr.mxu0 0.0
        %552 = vmatpush1.msra.mxu0 0.0
        %553 = vmatprep.subr.mxu0 0.0
        %554 = vmatpush1.msra.mxu0 0.0
        %555 = vmatprep.subr.mxu0 0.0
        %556 = vmatpush1.msra.mxu0 0.0
        %557 = vmatprep.subr.mxu0 0.0
        %558 = vmatpush1.msra.mxu0 0.0
        %559 = vmatprep.subr.mxu0 0.0
        %560 = vmatpush1.msra.mxu0 0.0
        %561 = vmatprep.subr.mxu0 0.0
        %562 = vmatpush1.msra.mxu0 0.0
        %563 = vmatprep.subr.mxu0 0.0
        %564 = vmatpush1.msra.mxu0 0.0
        %565 = vmatprep.subr.mxu0 0.0
        %566 = vmatpush1.msra.mxu0 0.0
        %567 = vmatprep.subr.mxu0 0.0
        %568 = vmatpush1.msra.mxu0 0.0
        %569 = vmatprep.subr.mxu0 0.0
        %570 = vmatpush1.msra.mxu0 0.0
        %571 = vmatprep.mubr.f32.mxu0 0.0
        %572 = vmatmul.mubr.f32.gmra.mrb[0].mxu0 %v492
        %v573 = vpop.f32.mrb[0].mxu0
        %v574 = vadd.f32 0.0, %v573
        %v575 = vpop.f32.mrb[0].mxu0
        %576 = vmatprep.mubr.f32.mxu0 0.0
        %577 = vmatmul.mubr.f32.gmra.mrb[0].mxu0 %v495
        %v578 = vpop.f32.mrb[0].mxu0
        %v579 = vadd.f32 0.0, %v578
        %v580 = vpop.f32.mrb[0].mxu0
        %581 = vmatprep.mubr.f32.mxu0 0.0
        %582 = vmatmul.mubr.f32.gmra.mrb[0].mxu0 %v498
        %v583 = vpop.f32.mrb[0].mxu0
        %v584 = vadd.f32 0.0, %v583
        %v585 = vpop.f32.mrb[0].mxu0
        %586 = vmatprep.mubr.f32.mxu0 0.0
        %587 = vmatmul.mubr.f32.gmra.mrb[0].mxu0 %v501
        %v588 = vpop.f32.mrb[0].mxu0
        %v589 = vadd.f32 0.0, %v588
        %v590 = vpop.f32.mrb[0].mxu0
        %591 = vdwg.mxu0
        %v592 = vld [vmem:[%s457] sm:$0xff]
        %v593 = vld [vmem:[%s457 + $0x8] sm:$0xff]
        %v594 = vld [vmem:[%s457 + $0x10] sm:$0xff]
        %v595 = vld [vmem:[%s457 + $0x18] sm:$0xff]
        %v596 = vld [vmem:[%s474] sm:$0x1]
        %598 = vset.pattern.permute.xlu0 0
        %599 = vperm.xlu0 %598, %v592
        %v600 = vpop.permute.xlu0 %599
        %603 = vset.pattern.permute.xlu0 0
        %604 = vperm.xlu0 %603, %v593
        %v605 = vpop.permute.xlu0 %604
        %608 = vset.pattern.permute.xlu0 0
        %609 = vperm.xlu0 %608, %v594
        %v610 = vpop.permute.xlu0 %609
        %613 = vset.pattern.permute.xlu0 0
        %614 = vperm.xlu0 %613, %v595
        %v615 = vpop.permute.xlu0 %614
        %v618 = vlaneseq
        %v619 = vshrl.u32 %v618, 7
        %v620 = vsub.s32 0, %v619
        %v621 = vrot.slane %v596, %v620
        %v623 = vadd.f32 %v600, %v621
        %v624 = vadd.f32 %v605, %v621
        %v625 = vadd.f32 %v610, %v621
        %v626 = vadd.f32 %v615, %v621
        %v627 = vmul.f32 %v574, 2.0
        %v628 = vmul.f32 %v579, 2.0
        %v629 = vmul.f32 %v584, 2.0
        %v630 = vmul.f32 %v589, 2.0
        %v631 = vsub.f32 %v623, %v627
        %v632 = vsub.f32 %v624, %v628
        %v633 = vsub.f32 %v625, %v629
        %v634 = vsub.f32 %v626, %v630
        %v635 = vmax.f32 %v631, 0.0
        %v636 = vmax.f32 %v632, 0.0
        %v637 = vmax.f32 %v633, 0.0
        %v638 = vmax.f32 %v634, 0.0
        %v639 = vlaneseq
        %v640 = vand.u32 %v639, 127
        %v645 = vand.u32 %v635, 4294967168
        %v646 = vand.u32 %v636, 4294967168
        %v647 = vand.u32 %v637, 4294967168
        %v648 = vand.u32 %v638, 4294967168
        %v649 = vor.u32 %v645, %v640
        %v650 = vor.u32 %v646, %v640
        %v651 = vor.u32 %v647, %v640
        %v652 = vor.u32 %v648, %v640
        %657 = vmin.xlane.f32.xlu0 %v649
        %v658 = vpop.xlane.xlu0 %657
        %659 = vmin.xlane.f32.xlu0 %v650
        %v660 = vpop.xlane.xlu0 %659
        %661 = vmin.xlane.f32.xlu0 %v651
        %v662 = vpop.xlane.xlu0 %661
        %663 = vmin.xlane.f32.xlu0 %v652
        %v664 = vpop.xlane.xlu0 %663
        %v669 = vand.u32 %v658, 4294967168
        %v670 = vand.u32 %v660, 4294967168
        %v671 = vand.u32 %v662, 4294967168
        %v672 = vand.u32 %v664, 4294967168
        %v677 = vmax.f32 %v669, 1e-16
        %v678 = vmax.f32 %v670, 1e-16
        %v679 = vmax.f32 %v671, 1e-16
        %v680 = vmax.f32 %v672, 1e-16
        %v681 = vrcp.pop %v677
        %v682 = vmul.f32 1.0, %v681
        %v683 = vrcp.pop %v678
        %v684 = vmul.f32 1.0, %v683
        %v685 = vrcp.pop %v679
        %v686 = vmul.f32 1.0, %v685
        %v687 = vrcp.pop %v680
        %v688 = vmul.f32 1.0, %v687
        %vm689 = vcmp.eq.f32.partialorder %v649, %v658
        %vm690 = vcmp.eq.f32.partialorder %v650, %v660
        %vm691 = vcmp.eq.f32.partialorder %v651, %v662
        %vm692 = vcmp.eq.f32.partialorder %v652, %v664
        %v693 = vsel %vm689, %v682, 0.0
        %v694 = vsel %vm690, %v684, 0.0
        %v695 = vsel %vm691, %v686, 0.0
        %v696 = vsel %vm692, %v688, 0.0
        %v697 = vadd.f32 %v682, 0.0
        %v698 = vadd.f32 %v684, 0.0
        %v699 = vadd.f32 %v686, 0.0
        %v700 = vadd.f32 %v688, 0.0
        %v701 = vsel %vm689, 3e+38, %v649
        %v702 = vsel %vm690, 3e+38, %v650
        %v703 = vsel %vm691, 3e+38, %v651
        %v704 = vsel %vm692, 3e+38, %v652
        %705 = vmin.xlane.f32.xlu0 %v701
        %v706 = vpop.xlane.xlu0 %705
        %707 = vmin.xlane.f32.xlu0 %v702
        %v708 = vpop.xlane.xlu0 %707
        %709 = vmin.xlane.f32.xlu0 %v703
        %v710 = vpop.xlane.xlu0 %709
        %711 = vmin.xlane.f32.xlu0 %v704
        %v712 = vpop.xlane.xlu0 %711
        %v717 = vand.u32 %v706, 4294967168
        %v718 = vand.u32 %v708, 4294967168
        %v719 = vand.u32 %v710, 4294967168
        %v720 = vand.u32 %v712, 4294967168
        %v725 = vmax.f32 %v717, 1e-16
        %v726 = vmax.f32 %v718, 1e-16
        %v727 = vmax.f32 %v719, 1e-16
        %v728 = vmax.f32 %v720, 1e-16
        %v729 = vrcp.pop %v725
        %v730 = vmul.f32 1.0, %v729
        %v731 = vrcp.pop %v726
        %v732 = vmul.f32 1.0, %v731
        %v733 = vrcp.pop %v727
        %v734 = vmul.f32 1.0, %v733
        %v735 = vrcp.pop %v728
        %v736 = vmul.f32 1.0, %v735
        %vm737 = vcmp.eq.f32.partialorder %v701, %v706
        %vm738 = vcmp.eq.f32.partialorder %v702, %v708
        %vm739 = vcmp.eq.f32.partialorder %v703, %v710
        %vm740 = vcmp.eq.f32.partialorder %v704, %v712
        %v741 = vsel %vm737, %v730, %v693
        %v742 = vsel %vm738, %v732, %v694
        %v743 = vsel %vm739, %v734, %v695
        %v744 = vsel %vm740, %v736, %v696
        %v745 = vadd.f32 %v697, %v730
        %v746 = vadd.f32 %v698, %v732
        %v747 = vadd.f32 %v699, %v734
        %v748 = vadd.f32 %v700, %v736
        %v749 = vsel %vm737, 3e+38, %v701
        %v750 = vsel %vm738, 3e+38, %v702
        %v751 = vsel %vm739, 3e+38, %v703
        %v752 = vsel %vm740, 3e+38, %v704
        %753 = vmin.xlane.f32.xlu0 %v749
        %v754 = vpop.xlane.xlu0 %753
        %755 = vmin.xlane.f32.xlu0 %v750
        %v756 = vpop.xlane.xlu0 %755
        %757 = vmin.xlane.f32.xlu0 %v751
        %v758 = vpop.xlane.xlu0 %757
        %759 = vmin.xlane.f32.xlu0 %v752
        %v760 = vpop.xlane.xlu0 %759
        %v765 = vand.u32 %v754, 4294967168
        %v766 = vand.u32 %v756, 4294967168
        %v767 = vand.u32 %v758, 4294967168
        %v768 = vand.u32 %v760, 4294967168
        %v773 = vmax.f32 %v765, 1e-16
        %v774 = vmax.f32 %v766, 1e-16
        %v775 = vmax.f32 %v767, 1e-16
        %v776 = vmax.f32 %v768, 1e-16
        %v777 = vrcp.pop %v773
        %v778 = vmul.f32 1.0, %v777
        %v779 = vrcp.pop %v774
        %v780 = vmul.f32 1.0, %v779
        %v781 = vrcp.pop %v775
        %v782 = vmul.f32 1.0, %v781
        %v783 = vrcp.pop %v776
        %v784 = vmul.f32 1.0, %v783
        %vm785 = vcmp.eq.f32.partialorder %v749, %v754
        %vm786 = vcmp.eq.f32.partialorder %v750, %v756
        %vm787 = vcmp.eq.f32.partialorder %v751, %v758
        %vm788 = vcmp.eq.f32.partialorder %v752, %v760
        %v789 = vsel %vm785, %v778, %v741
        %v790 = vsel %vm786, %v780, %v742
        %v791 = vsel %vm787, %v782, %v743
        %v792 = vsel %vm788, %v784, %v744
        %v793 = vadd.f32 %v745, %v778
        %v794 = vadd.f32 %v746, %v780
        %v795 = vadd.f32 %v747, %v782
        %v796 = vadd.f32 %v748, %v784
        %v797 = vrcp.pop %v793
        %v798 = vrcp.pop %v794
        %v799 = vrcp.pop %v795
        %v800 = vrcp.pop %v796
        %v801 = vmul.f32 %v789, %v797
        %v802 = vmul.f32 %v790, %v798
        %v803 = vmul.f32 %v791, %v799
        %v804 = vmul.f32 %v792, %v800
        %v805 = vpack.c.bf16 %v802, %v801
        %v806 = vpack.c.bf16 %v804, %v803
        %v807 = vld [vmem:[%s481] sm:$0xf]
        %v808 = vld [vmem:[%s481 + $0x4] sm:$0xf]
        %v809 = vld [vmem:[%s481 + $0x8] sm:$0xf]
        %v810 = vld [vmem:[%s481 + $0xc] sm:$0xf]
        %v811 = vld [vmem:[%s481 + $0x10] sm:$0xf]
        %v812 = vld [vmem:[%s481 + $0x14] sm:$0xf]
        %v813 = vld [vmem:[%s481 + $0x18] sm:$0xf]
        %v814 = vld [vmem:[%s481 + $0x1c] sm:$0xf]
        %v815 = vld [vmem:[%s481 + $0x20] sm:$0xf]
        %v816 = vld [vmem:[%s481 + $0x24] sm:$0xf]
        %v817 = vld [vmem:[%s481 + $0x28] sm:$0xf]
        %v818 = vld [vmem:[%s481 + $0x2c] sm:$0xf]
        %v819 = vld [vmem:[%s481 + $0x30] sm:$0xf]
        %v820 = vld [vmem:[%s481 + $0x34] sm:$0xf]
        %v821 = vld [vmem:[%s481 + $0x38] sm:$0xf]
        %v822 = vld [vmem:[%s481 + $0x3c] sm:$0xf]
        %v823 = vld [vmem:[%s463] sm:$0xf]
        %v824 = vld [vmem:[%s463 + $0x4] sm:$0xf]
        %v825 = vld [vmem:[%s463 + $0x8] sm:$0xf]
        %v826 = vld [vmem:[%s463 + $0xc] sm:$0xf]
        %v827 = vld [vmem:[%s7] sm:$0xf]
        %v832 = vunpack.c.l.b16 %v823
        %v833 = vunpack.c.l.b16 %v824
        %v834 = vunpack.c.l.b16 %v825
        %v835 = vunpack.c.l.b16 %v826
        %v836 = vpack.c.b16 %v833, %v832
        %v837 = vpack.c.b16 %v835, %v834
        %vm838 = vcmask 64512
        %v840 = vsel %vm838, %v836, 0
        %v843 = vsel %vm838, %v837, 0
        %vm845 = vcmask 1043456
        %v847 = vsel %vm845, %v827, 0
        %849 = vmatprep.subr.bf16.mxu0 0
        %850 = vmatpush1.bf16.msra.mxu0 %v847
        %851 = vmatprep.subr.bf16.mxu0 0
        %852 = vmatpush1.bf16.msra.mxu0 0
        %853 = vmatprep.subr.bf16.mxu0 0
        %854 = vmatpush1.bf16.msra.mxu0 0
        %855 = vmatprep.subr.bf16.mxu0 0
        %856 = vmatpush1.bf16.msra.mxu0 0
        %857 = vmatprep.subr.bf16.mxu0 0
        %858 = vmatpush1.bf16.msra.mxu0 0
        %859 = vmatprep.subr.bf16.mxu0 0
        %860 = vmatpush1.bf16.msra.mxu0 0
        %861 = vmatprep.subr.bf16.mxu0 0
        %862 = vmatpush1.bf16.msra.mxu0 0
        %863 = vmatprep.subr.bf16.mxu0 0
        %864 = vmatpush1.bf16.msra.mxu0 0
        %865 = vmatprep.subr.bf16.mxu0 0
        %866 = vmatpush1.bf16.msra.mxu0 0
        %867 = vmatprep.subr.bf16.mxu0 0
        %868 = vmatpush1.bf16.msra.mxu0 0
        %869 = vmatprep.subr.bf16.mxu0 0
        %870 = vmatpush1.bf16.msra.mxu0 0
        %871 = vmatprep.subr.bf16.mxu0 0
        %872 = vmatpush1.bf16.msra.mxu0 0
        %873 = vmatprep.subr.bf16.mxu0 0
        %874 = vmatpush1.bf16.msra.mxu0 0
        %875 = vmatprep.subr.bf16.mxu0 0
        %876 = vmatpush1.bf16.msra.mxu0 0
        %877 = vmatprep.subr.bf16.mxu0 0
        %878 = vmatpush1.bf16.msra.mxu0 0
        %879 = vmatprep.subr.bf16.mxu0 0
        %880 = vmatpush1.bf16.msra.mxu0 0
        %881 = vmatprep.mubr.bf16.mxu0 0
        %882 = vmatmul.mubr.bf16.gmra.mrb[0].mxu0 %v840
        %v883 = vpop.f32.mrb[0].mxu0
        %v884 = vadd.f32 0.0, %v883
        %v885 = vpop.f32.mrb[0].mxu0
        %v886 = vpop.f32.mrb[0].mxu0
        %v887 = vadd.f32 0.0, %v886
        %v888 = vpop.f32.mrb[0].mxu0
        %889 = vmatprep.mubr.bf16.mxu0 0
        %890 = vmatmul.mubr.bf16.gmra.mrb[0].mxu0 %v843
        %v891 = vpop.f32.mrb[0].mxu0
        %v892 = vadd.f32 0.0, %v891
        %v893 = vpop.f32.mrb[0].mxu0
        %v894 = vpop.f32.mrb[0].mxu0
        %v895 = vadd.f32 0.0, %v894
        %v896 = vpop.f32.mrb[0].mxu0
        %897 = vdwg.mxu0
        %v914 = vunpack.c.l.b16 %v807
        %v915 = vunpack.c.l.b16 %v808
        %v916 = vunpack.c.l.b16 %v809
        %v917 = vunpack.c.l.b16 %v810
        %v918 = vunpack.c.l.b16 %v811
        %v919 = vunpack.c.l.b16 %v812
        %v920 = vunpack.c.l.b16 %v813
        %v921 = vunpack.c.l.b16 %v814
        %v922 = vunpack.c.l.b16 %v815
        %v923 = vunpack.c.l.b16 %v816
        %v924 = vunpack.c.l.b16 %v817
        %v925 = vunpack.c.l.b16 %v818
        %v926 = vunpack.c.l.b16 %v819
        %v927 = vunpack.c.l.b16 %v820
        %v928 = vunpack.c.l.b16 %v821
        %v929 = vunpack.c.l.b16 %v822
        %v930 = vpack.c.b16 %v915, %v914
        %v931 = vpack.c.b16 %v917, %v916
        %v932 = vpack.c.b16 %v919, %v918
        %v933 = vpack.c.b16 %v921, %v920
        %v934 = vpack.c.b16 %v923, %v922
        %v935 = vpack.c.b16 %v925, %v924
        %v936 = vpack.c.b16 %v927, %v926
        %v937 = vpack.c.b16 %v929, %v928
        %946 = vmatprep.subr.bf16.mxu0 0
        %947 = vmatpush1.bf16.msra.mxu0 %v930
        %948 = vmatprep.subr.bf16.mxu0 0
        %949 = vmatpush1.bf16.msra.mxu0 %v931
        %950 = vmatprep.subr.bf16.mxu0 0
        %951 = vmatpush1.bf16.msra.mxu0 %v932
        %952 = vmatprep.subr.bf16.mxu0 0
        %953 = vmatpush1.bf16.msra.mxu0 %v933
        %954 = vmatprep.subr.bf16.mxu0 0
        %955 = vmatpush1.bf16.msra.mxu0 %v934
        %956 = vmatprep.subr.bf16.mxu0 0
        %957 = vmatpush1.bf16.msra.mxu0 %v935
        %958 = vmatprep.subr.bf16.mxu0 0
        %959 = vmatpush1.bf16.msra.mxu0 %v936
        %960 = vmatprep.subr.bf16.mxu0 0
        %961 = vmatpush1.bf16.msra.mxu0 %v937
        %962 = vmatprep.subr.bf16.mxu0 0
        %963 = vmatpush1.bf16.msra.mxu0 0
        %964 = vmatprep.subr.bf16.mxu0 0
        %965 = vmatpush1.bf16.msra.mxu0 0
        %966 = vmatprep.subr.bf16.mxu0 0
        %967 = vmatpush1.bf16.msra.mxu0 0
        %968 = vmatprep.subr.bf16.mxu0 0
        %969 = vmatpush1.bf16.msra.mxu0 0
        %970 = vmatprep.subr.bf16.mxu0 0
        %971 = vmatpush1.bf16.msra.mxu0 0
        %972 = vmatprep.subr.bf16.mxu0 0
        %973 = vmatpush1.bf16.msra.mxu0 0
        %974 = vmatprep.subr.bf16.mxu0 0
        %975 = vmatpush1.bf16.msra.mxu0 0
        %976 = vmatprep.subr.bf16.mxu0 0
        %977 = vmatpush1.bf16.msra.mxu0 0
        %978 = vmatprep.mubr.bf16.mxu0 0
        %979 = vmatmul.mubr.bf16.gmra.mrb[0].mxu0 %v805
        %v980 = vpop.f32.mrb[0].mxu0
        %v981 = vadd.f32 %v884, %v980
        %v982 = vpop.f32.mrb[0].mxu0
        %v983 = vpop.f32.mrb[0].mxu0
        %v984 = vadd.f32 %v887, %v983
        %v985 = vpop.f32.mrb[0].mxu0
        %986 = vmatprep.mubr.bf16.mxu0 0
        %987 = vmatmul.mubr.bf16.gmra.mrb[0].mxu0 %v806
        %v988 = vpop.f32.mrb[0].mxu0
        %v989 = vadd.f32 %v892, %v988
        %v990 = vpop.f32.mrb[0].mxu0
        %v991 = vpop.f32.mrb[0].mxu0
        %v992 = vadd.f32 %v895, %v991
        %v993 = vpop.f32.mrb[0].mxu0
        %994 = vdwg.mxu0
        %v995 = vld [vmem:[%s8] sm:$0x1]
        %v997 = vlaneseq
        %v998 = vshrl.u32 %v997, 7
        %v999 = vsub.s32 0, %v998
        %v1000 = vrot.slane %v995, %v999
        %v1002 = vadd.f32 %v981, %v1000
        %v1003 = vadd.f32 %v984, %v1000
        %v1004 = vadd.f32 %v989, %v1000
        %v1005 = vadd.f32 %v992, %v1000
        %v1006 = vmax.f32 %v1002, 0.0
        %v1007 = vmax.f32 %v1003, 0.0
        %v1008 = vmax.f32 %v1004, 0.0
        %v1009 = vmax.f32 %v1005, 0.0
        %v1010 = vpack.c.bf16 %v1007, %v1006
        %v1011 = vpack.c.bf16 %v1009, %v1008
        %v1012 = vld [vmem:[%s9] sm:$0xf]
        %v1013 = vld [vmem:[%s9 + $0x4] sm:$0xf]
        %v1014 = vld [vmem:[%s9 + $0x8] sm:$0xf]
        %v1015 = vld [vmem:[%s9 + $0xc] sm:$0xf]
        %v1016 = vld [vmem:[%s9 + $0x10] sm:$0xf]
        %v1017 = vld [vmem:[%s9 + $0x14] sm:$0xf]
        %v1018 = vld [vmem:[%s9 + $0x18] sm:$0xf]
        %v1019 = vld [vmem:[%s9 + $0x1c] sm:$0xf]
        %v1020 = vld [vmem:[%s9 + $0x20] sm:$0xf]
        %v1021 = vld [vmem:[%s9 + $0x24] sm:$0xf]
        %v1022 = vld [vmem:[%s9 + $0x28] sm:$0xf]
        %v1023 = vld [vmem:[%s9 + $0x2c] sm:$0xf]
        %v1024 = vld [vmem:[%s9 + $0x30] sm:$0xf]
        %v1025 = vld [vmem:[%s9 + $0x34] sm:$0xf]
        %v1026 = vld [vmem:[%s9 + $0x38] sm:$0xf]
        %v1027 = vld [vmem:[%s9 + $0x3c] sm:$0xf]
        %v1028 = vld [vmem:[%s10] sm:$0x1]
        %v1030 = vlaneseq
        %v1031 = vshrl.u32 %v1030, 7
        %v1032 = vsub.s32 0, %v1031
        %v1033 = vrot.slane %v1028, %v1032
        %v1051 = vunpack.c.l.b16 %v1012
        %v1052 = vunpack.c.l.b16 %v1013
        %v1053 = vunpack.c.l.b16 %v1014
        %v1054 = vunpack.c.l.b16 %v1015
        %v1055 = vunpack.c.l.b16 %v1016
        %v1056 = vunpack.c.l.b16 %v1017
        %v1057 = vunpack.c.l.b16 %v1018
        %v1058 = vunpack.c.l.b16 %v1019
        %v1059 = vunpack.c.l.b16 %v1020
        %v1060 = vunpack.c.l.b16 %v1021
        %v1061 = vunpack.c.l.b16 %v1022
        %v1062 = vunpack.c.l.b16 %v1023
        %v1063 = vunpack.c.l.b16 %v1024
        %v1064 = vunpack.c.l.b16 %v1025
        %v1065 = vunpack.c.l.b16 %v1026
        %v1066 = vunpack.c.l.b16 %v1027
        %v1067 = vpack.c.b16 %v1052, %v1051
        %v1068 = vpack.c.b16 %v1054, %v1053
        %v1069 = vpack.c.b16 %v1056, %v1055
        %v1070 = vpack.c.b16 %v1058, %v1057
        %v1071 = vpack.c.b16 %v1060, %v1059
        %v1072 = vpack.c.b16 %v1062, %v1061
        %v1073 = vpack.c.b16 %v1064, %v1063
        %v1074 = vpack.c.b16 %v1066, %v1065
        %1083 = vmatprep.subr.bf16.mxu0 0
        %1084 = vmatpush1.bf16.msra.mxu0 %v1067
        %1085 = vmatprep.subr.bf16.mxu0 0
        %1086 = vmatpush1.bf16.msra.mxu0 %v1068
        %1087 = vmatprep.subr.bf16.mxu0 0
        %1088 = vmatpush1.bf16.msra.mxu0 %v1069
        %1089 = vmatprep.subr.bf16.mxu0 0
        %1090 = vmatpush1.bf16.msra.mxu0 %v1070
        %1091 = vmatprep.subr.bf16.mxu0 0
        %1092 = vmatpush1.bf16.msra.mxu0 %v1071
        %1093 = vmatprep.subr.bf16.mxu0 0
        %1094 = vmatpush1.bf16.msra.mxu0 %v1072
        %1095 = vmatprep.subr.bf16.mxu0 0
        %1096 = vmatpush1.bf16.msra.mxu0 %v1073
        %1097 = vmatprep.subr.bf16.mxu0 0
        %1098 = vmatpush1.bf16.msra.mxu0 %v1074
        %1099 = vmatprep.subr.bf16.mxu0 0
        %1100 = vmatpush1.bf16.msra.mxu0 0
        %1101 = vmatprep.subr.bf16.mxu0 0
        %1102 = vmatpush1.bf16.msra.mxu0 0
        %1103 = vmatprep.subr.bf16.mxu0 0
        %1104 = vmatpush1.bf16.msra.mxu0 0
        %1105 = vmatprep.subr.bf16.mxu0 0
        %1106 = vmatpush1.bf16.msra.mxu0 0
        %1107 = vmatprep.subr.bf16.mxu0 0
        %1108 = vmatpush1.bf16.msra.mxu0 0
        %1109 = vmatprep.subr.bf16.mxu0 0
        %1110 = vmatpush1.bf16.msra.mxu0 0
        %1111 = vmatprep.subr.bf16.mxu0 0
        %1112 = vmatpush1.bf16.msra.mxu0 0
        %1113 = vmatprep.subr.bf16.mxu0 0
        %1114 = vmatpush1.bf16.msra.mxu0 0
        %1115 = vmatprep.mubr.bf16.mxu0 0
        %1116 = vmatmul.mubr.bf16.gmra.mrb[0].mxu0 %v1010
        %v1117 = vpop.f32.mrb[0].mxu0
        %v1118 = vadd.f32 %v1033, %v1117
        %v1119 = vpop.f32.mrb[0].mxu0
        %v1120 = vpop.f32.mrb[0].mxu0
        %v1121 = vadd.f32 %v1033, %v1120
        %v1122 = vpop.f32.mrb[0].mxu0
        %1123 = vmatprep.mubr.bf16.mxu0 0
        %1124 = vmatmul.mubr.bf16.gmra.mrb[0].mxu0 %v1011
        %v1125 = vpop.f32.mrb[0].mxu0
        %v1126 = vadd.f32 %v1033, %v1125
        %v1127 = vpop.f32.mrb[0].mxu0
        %v1128 = vpop.f32.mrb[0].mxu0
        %v1129 = vadd.f32 %v1033, %v1128
        %v1130 = vpop.f32.mrb[0].mxu0
        %1131 = vdwg.mxu0
        %1132 = vst [vmem:[%s446] sm:$0xff] %v1118
        %1133 = vst [vmem:[%s446 + $0x8] sm:$0xff] %v1121
        %1134 = vst [vmem:[%s446 + $0x10] sm:$0xff] %v1126
        %1135 = vst [vmem:[%s446 + $0x18] sm:$0xff] %v1129
        %s1136 = sand.u32 %s285, 1
        %s1137 = scalar_lea.sflag [#allocation5], %s1136
        %s1138 = sand.u32 %s285, 1
        %s1139 = smul.addr %s1138, 32
        %s1140 = scalar_lea.vmem [#allocation4], %s1139
        // Predicated region
        $region61: #{tpu_custom_call.1} parent=59 // pred_check
          %p1141 = pneg %p295
        $region62: #{tpu_custom_call.1} parent=59 // pred_check_branch
          %1143 = sbr.rel (%p1141) target = $region64
        $region63: #{tpu_custom_call.1} parent=59 // pred_region
          %s1144 = smul.u32 4, %s31
          %s1146 = ssub.s32 512, 512
          %1147 = vsyncadd %s1137, %s1146
          %s1148 = smul.addr %s1144, 128
          %s1149 = scalar_lea.hbm %s11, %s1148
          %s1150 = sshll.u32 %s1140, 4
          %s1151 = int_to_ptr.vmem [resolvable:$true] %s1150
          %1156 = dma.vmem_to_hbm [thread:$0]  %s1151, 512, %s1149, %s1137, 128, 128, 8
        $region64: #{tpu_custom_call.1} parent=59 // pred_fallthru
          _
      $region60: #{tpu_custom_call.1} parent=5 // pred_fallthru
        _
      %p1157 = scmp.le.s32.totalorder 2, %s26
      // Predicated region
      $region65: #{tpu_custom_call.1} parent=5 // pred_check
        %p1158 = pneg %p1157
      $region66: #{tpu_custom_call.1} parent=5 // pred_check_branch
        %1160 = sbr.rel (%p1158) target = $region68
      $region67: #{tpu_custom_call.1} parent=5 // pred_region
        %s1161 = ssub.s32 %s26, 2
        // Predicated region
        $region69: #{tpu_custom_call.1} parent=67 // pred_check
          %p1162 = pneg %p301
        $region70: #{tpu_custom_call.1} parent=67 // pred_check_branch
          %1164 = sbr.rel (%p1162) target = $region72
        $region71: #{tpu_custom_call.1} parent=67 // pred_region
          %s1165 = sand.u32 %s286, 1
          %s1166 = scalar_lea.sflag [#allocation5], %s1165
          %s1167 = sand.u32 %s286, 1
          %s1168 = smul.addr %s1167, 32
          %s1169 = scalar_lea.vmem [#allocation4], %s1168
          %1170 = dma.done %s1166, 512
        $region72: #{tpu_custom_call.1} parent=67 // pred_fallthru
          _
      $region68: #{tpu_custom_call.1} parent=5 // pred_fallthru
        _
    $region6: #{tpu_custom_call.1} parent=1 // loop_footer
      %s30 = sadd.s32 1, %s26
    $region7: #{tpu_custom_call.1} parent=1 // loop_footer_branch
      %25 = sbr.rel target = $region3
    $region8: #{tpu_custom_call.1} parent=1 // loop_exit
      _
    %1171 = vsyncpa [#allocation5], 1
    %s1172 = scalar_lea.sflag [#allocation5], 1
    %1173 = vsyncpa %s1172, 1

</llo_original>
